<compile_context>
chip_gen: v6e
topology: v6e:2x2x1
jax: 0.10.0
libtpu: 0.0.40
codegen_flags: <defaults>
</compile_context>

<pallas_src>
import jax
import jax.numpy as jnp
from jax import lax
from jax.experimental import pallas as pl
from jax.experimental.pallas import tpu as pltpu


_PI_MODULE = 3.14159265   # self.pi used by SP_loss for two_pi_n
_LOW_BOUND = 40
_HIGH_BOUND = 150
_FPS = 30.0


def _sp_loss_kernel(gt_ref, wave_ref, hann_ref, sin_ref, cos_ref,
                    loss_ref, idx_ref):
    B = wave_ref.shape[0]
    F = sin_ref.shape[1]

    # ---- target computation (hr clamp), mirrors the torch code ----
    hr = gt_ref[...].astype(jnp.float32)                              # (B, 1)
    hr = jnp.where(hr >= float(_HIGH_BOUND), float(_HIGH_BOUND - 1), hr)
    hr = jnp.where(hr <= float(_LOW_BOUND), float(_LOW_BOUND), hr)
    target = (hr - float(_LOW_BOUND)).astype(jnp.int32)               # (B, 1)

    # ---- Hann window (VPU) + projection onto sin/cos basis (MXU) ----
    preds = wave_ref[...].astype(jnp.float32) * hann_ref[...].astype(jnp.float32)
    s = jnp.dot(preds, sin_ref[...], precision=lax.Precision.HIGHEST,
                preferred_element_type=jnp.float32)                   # (B, F)
    c = jnp.dot(preds, cos_ref[...], precision=lax.Precision.HIGHEST,
                preferred_element_type=jnp.float32)                   # (B, F)
    ca = s * s + c * c                                                # complex_absolute

    # ---- whole_max_idx = argmax over frequency bins + low_bound ----
    col = lax.broadcasted_iota(jnp.int32, (B, F), 1)
    m = jnp.max(ca, axis=1, keepdims=True)                            # (B, 1)
    colf = col.astype(jnp.float32)
    first_max = jnp.min(jnp.where(ca == m, colf, jnp.float32(1e9)),
                        axis=1, keepdims=True)                        # (B, 1)
    idx_ref[...] = first_max.astype(jnp.int32) + _LOW_BOUND

    # ---- cross-entropy (mean reduction), stable log-softmax ----
    picked = jnp.sum(jnp.where(col == target, ca, 0.0),
                     axis=1, keepdims=True)                           # (B, 1)
    lse = m + jnp.log(jnp.sum(jnp.exp(ca - m), axis=1, keepdims=True))
    loss_ref[0, 0] = jnp.sum(lse - picked) / B


def sp_loss(wave: jax.Array, gt: jax.Array, pred=None, flag=None,
            clip_length: int = 256):
    """SP_loss.forward (loss_type == 1): returns (loss, whole_max_idx).

    wave: (B, clip_length) float; gt: (B,) heart rates.
    """
    # TODO(synk): loss_type == 7 branch (per-sample dynamic-length SNR slice
    # sums) is not translated; `pred`/`flag` are unused for the returned
    # values in the default loss_type == 1 path.
    B, T = wave.shape
    assert T == clip_length
    F = _HIGH_BOUND - _LOW_BOUND  # 110 frequency bins

    # Constant bases (depend only on module constants), laid out (T, F) so the
    # in-kernel matmul is direct and lane-dense (no in-kernel transpose).
    f_t = (jnp.arange(_LOW_BOUND, _HIGH_BOUND, dtype=jnp.float32) / 60.0) / _FPS
    two_pi_n = 2.0 * _PI_MODULE * jnp.arange(T, dtype=jnp.float32)
    ang = two_pi_n[:, None] * f_t[None, :]                            # (T, F)
    sin_b = jnp.sin(ang)
    cos_b = jnp.cos(ang)
    # np.hanning(T) = 0.5 - 0.5 * cos(2*pi*n / (T-1))
    hann = (0.5 - 0.5 * jnp.cos(
        2.0 * jnp.pi * jnp.arange(T, dtype=jnp.float32) / (T - 1))
    ).reshape(1, T)

    gt2d = gt.reshape(B, 1)

    loss_out, idx_out = pl.pallas_call(
        _sp_loss_kernel,
        out_shape=(
            jax.ShapeDtypeStruct((1, 1), jnp.float32),
            jax.ShapeDtypeStruct((B, 1), jnp.int32),
        ),
        grid_spec=pltpu.PrefetchScalarGridSpec(
            num_scalar_prefetch=0,
            grid=(1,),
            in_specs=[
                pl.BlockSpec((B, 1), lambda i: (0, 0)),   # gt
                pl.BlockSpec((B, T), lambda i: (0, 0)),   # wave
                pl.BlockSpec((1, T), lambda i: (0, 0)),   # hanning
                pl.BlockSpec((T, F), lambda i: (0, 0)),   # sin basis
                pl.BlockSpec((T, F), lambda i: (0, 0)),   # cos basis
            ],
            out_specs=[
                pl.BlockSpec((1, 1), lambda i: (0, 0), memory_space=pltpu.SMEM),
                pl.BlockSpec((B, 1), lambda i: (0, 0)),
            ],
        ),
        compiler_params=pltpu.CompilerParams(
            dimension_semantics=("arbitrary",),
            vmem_limit_bytes=32 * 1024 * 1024,
        ),
    )(gt2d, wave, hann, sin_b, cos_b)

    return loss_out[0, 0], idx_out[:, 0]


def _sp_loss_ref(wave, gt, clip_length=256):
    # Pure-JAX mirror of the PyTorch forward (loss_type == 1).
    B, T = wave.shape
    F = _HIGH_BOUND - _LOW_BOUND
    hr = jnp.where(gt >= _HIGH_BOUND, float(_HIGH_BOUND - 1),
                   gt.astype(jnp.float32))
    hr = jnp.where(hr <= _LOW_BOUND, float(_LOW_BOUND), hr)
    target = (hr - _LOW_BOUND).astype(jnp.int32)

    f_t = (jnp.arange(_LOW_BOUND, _HIGH_BOUND, dtype=jnp.float32) / 60.0) / _FPS
    two_pi_n = 2.0 * _PI_MODULE * jnp.arange(T, dtype=jnp.float32)
    hann = 0.5 - 0.5 * jnp.cos(
        2.0 * jnp.pi * jnp.arange(T, dtype=jnp.float32) / (T - 1))

    preds = (wave.astype(jnp.float32) * hann[None, :])[:, None, :]    # (B,1,T)
    f_t3 = jnp.broadcast_to(f_t[None, :, None], (B, F, 1))
    tmp3 = jnp.broadcast_to(two_pi_n[None, None, :], (B, 1, T))
    ca = (jnp.sum(preds * jnp.sin(f_t3 * tmp3), axis=-1) ** 2
          + jnp.sum(preds * jnp.cos(f_t3 * tmp3), axis=-1) ** 2)      # (B, F)

    whole_max_idx = jnp.argmax(ca, axis=1).astype(jnp.int32) + _LOW_BOUND

    m = jnp.max(ca, axis=1, keepdims=True)
    lse = m[:, 0] + jnp.log(jnp.sum(jnp.exp(ca - m), axis=1))
    picked = jnp.take_along_axis(ca, target[:, None], axis=1)[:, 0]
    loss = jnp.mean(lse - picked)
    return loss, whole_max_idx


if __name__ == "__main__":
    key = jax.random.PRNGKey(0)
    B, T = 4, 256

    # Synthetic rPPG-like waves: dominant sinusoid per sample + small noise.
    t = jnp.arange(T, dtype=jnp.float32)
    true_bpm = jnp.array([72.0, 95.0, 110.0, 60.0], dtype=jnp.float32)
    phases = jnp.array([0.0, 0.7, 1.3, 2.1], dtype=jnp.float32)
    wave = (jnp.sin(2.0 * jnp.pi * (true_bpm[:, None] / 60.0 / _FPS)
                    * t[None, :] + phases[:, None])
            + 0.05 * jax.random.normal(key, (B, T), dtype=jnp.float32))
    gt = jnp.array([75.0, 90.0, 120.0, 58.0], dtype=jnp.float32)

    loss, idx = sp_loss(wave, gt)
    loss = jax.block_until_ready(loss)
    idx = jax.block_until_ready(idx)

    ref_loss, ref_idx = _sp_loss_ref(wave, gt)
    assert jnp.array_equal(idx, ref_idx), (idx, ref_idx)
    assert jnp.allclose(loss, ref_loss, rtol=2e-3, atol=2e-3), (loss, ref_loss)
    print("KERNEL_OK")
</pallas_src>

<mosaic_0001>
module attributes {stable_mosaic.version = 11 : i64} {
  func.func @_sp_loss_kernel(%arg0: i32, %arg1: memref<4x1xf32, #tpu.memory_space<vmem>>, %arg2: memref<4x256xf32, #tpu.memory_space<vmem>>, %arg3: memref<1x256xf32, #tpu.memory_space<vmem>>, %arg4: memref<256x110xf32, #tpu.memory_space<vmem>>, %arg5: memref<256x110xf32, #tpu.memory_space<vmem>>, %arg6: memref<1x1xf32, #tpu.memory_space<smem>>, %arg7: memref<4x1xi32, #tpu.memory_space<vmem>>) attributes {dimension_semantics = [#tpu.dimension_semantics<arbitrary>], iteration_bounds = array<i64: 1>, scalar_prefetch = 0 : i64, scratch_operands = 0 : i64, tpu.core_type = #tpu.core_type<tc>, window_params = [{pipeline_mode = #tpu.pipeline_mode<synchronous>, transform_indices = @transform_0, window_bounds = array<i64: 4, 1>}, {pipeline_mode = #tpu.pipeline_mode<synchronous>, transform_indices = @transform_1, window_bounds = array<i64: 4, 256>}, {pipeline_mode = #tpu.pipeline_mode<synchronous>, transform_indices = @transform_2, window_bounds = array<i64: 1, 256>}, {pipeline_mode = #tpu.pipeline_mode<synchronous>, transform_indices = @transform_3, window_bounds = array<i64: 256, 110>}, {pipeline_mode = #tpu.pipeline_mode<synchronous>, transform_indices = @transform_4, window_bounds = array<i64: 256, 110>}, {transform_indices = @transform_5, window_bounds = array<i64: 1, 1>}, {pipeline_mode = #tpu.pipeline_mode<synchronous>, transform_indices = @transform_6, window_bounds = array<i64: 4, 1>}]} {
    %c0 = arith.constant 0 : index
    %c0_0 = arith.constant 0 : index
    %0 = vector.load %arg1[%c0, %c0_0] : memref<4x1xf32, #tpu.memory_space<vmem>>, vector<4x1xf32>
    %cst = arith.constant 1.500000e+02 : f32
    %1 = vector.broadcast %cst : f32 to vector<4x1xf32>
    %2 = arith.cmpf oge, %0, %1 : vector<4x1xf32>
    %cst_1 = arith.constant 1.490000e+02 : f32
    %3 = vector.broadcast %cst_1 : f32 to vector<4x1xf32>
    %4 = arith.select %2, %3, %0 : vector<4x1xi1>, vector<4x1xf32>
    %cst_2 = arith.constant 4.000000e+01 : f32
    %5 = vector.broadcast %cst_2 : f32 to vector<4x1xf32>
    %6 = arith.cmpf ole, %4, %5 : vector<4x1xf32>
    %cst_3 = arith.constant 4.000000e+01 : f32
    %7 = vector.broadcast %cst_3 : f32 to vector<4x1xf32>
    %8 = arith.select %6, %7, %4 : vector<4x1xi1>, vector<4x1xf32>
    %cst_4 = arith.constant 4.000000e+01 : f32
    %9 = vector.broadcast %cst_4 : f32 to vector<4x1xf32>
    %10 = arith.subf %8, %9 : vector<4x1xf32>
    %11 = arith.fptosi %10 : vector<4x1xf32> to vector<4x1xi32>
    %c0_5 = arith.constant 0 : index
    %c0_6 = arith.constant 0 : index
    %12 = vector.load %arg2[%c0_5, %c0_6] : memref<4x256xf32, #tpu.memory_space<vmem>>, vector<4x256xf32>
    %c0_7 = arith.constant 0 : index
    %c0_8 = arith.constant 0 : index
    %13 = vector.load %arg3[%c0_7, %c0_8] : memref<1x256xf32, #tpu.memory_space<vmem>>, vector<1x256xf32>
    %14 = vector.broadcast %13 : vector<1x256xf32> to vector<4x256xf32>
    %15 = arith.mulf %12, %14 : vector<4x256xf32>
    %c0_9 = arith.constant 0 : index
    %c0_10 = arith.constant 0 : index
    %16 = vector.load %arg4[%c0_9, %c0_10] : memref<256x110xf32, #tpu.memory_space<vmem>>, vector<256x110xf32>
    %cst_11 = arith.constant dense<0.000000e+00> : vector<4x110xf32>
    %17 = tpu.matmul %15, %16, %cst_11 {dimension_numbers = #tpu.dot_dimension_numbers<[1], [0], [0], [1], [0, 0, 1, 1], [], []>, precision = #tpu.contract_precision<fp32>} : vector<4x256xf32>, vector<256x110xf32>, vector<4x110xf32> -> vector<4x110xf32>
    %c0_12 = arith.constant 0 : index
    %c0_13 = arith.constant 0 : index
    %18 = vector.load %arg5[%c0_12, %c0_13] : memref<256x110xf32, #tpu.memory_space<vmem>>, vector<256x110xf32>
    %cst_14 = arith.constant dense<0.000000e+00> : vector<4x110xf32>
    %19 = tpu.matmul %15, %18, %cst_14 {dimension_numbers = #tpu.dot_dimension_numbers<[1], [0], [0], [1], [0, 0, 1, 1], [], []>, precision = #tpu.contract_precision<fp32>} : vector<4x256xf32>, vector<256x110xf32>, vector<4x110xf32> -> vector<4x110xf32>
    %20 = arith.mulf %17, %17 : vector<4x110xf32>
    %21 = arith.mulf %19, %19 : vector<4x110xf32>
    %22 = arith.addf %20, %21 : vector<4x110xf32>
    %23 = tpu.iota {dimensions = array<i32: 1>} : vector<4x110xi32>
    %cst_15 = arith.constant dense<0xFF800000> : vector<4xf32>
    %24 = vector.multi_reduction <maximumf>, %22, %cst_15 [1] : vector<4x110xf32> to vector<4xf32>
    %25 = vector.shape_cast %24 : vector<4xf32> to vector<4x1xf32>
    %26 = arith.sitofp %23 : vector<4x110xi32> to vector<4x110xf32>
    %27 = vector.broadcast %25 : vector<4x1xf32> to vector<4x110xf32>
    %28 = arith.cmpf oeq, %22, %27 : vector<4x110xf32>
    %cst_16 = arith.constant 1.000000e+09 : f32
    %29 = vector.broadcast %cst_16 : f32 to vector<4x110xf32>
    %30 = arith.select %28, %26, %29 : vector<4x110xi1>, vector<4x110xf32>
    %cst_17 = arith.constant dense<0x7F800000> : vector<4xf32>
    %31 = vector.multi_reduction <minimumf>, %30, %cst_17 [1] : vector<4x110xf32> to vector<4xf32>
    %32 = vector.shape_cast %31 : vector<4xf32> to vector<4x1xf32>
    %33 = arith.fptosi %32 : vector<4x1xf32> to vector<4x1xi32>
    %c40_i32 = arith.constant 40 : i32
    %34 = vector.broadcast %c40_i32 : i32 to vector<4x1xi32>
    %35 = arith.addi %33, %34 : vector<4x1xi32>
    %c0_18 = arith.constant 0 : index
    %c0_19 = arith.constant 0 : index
    %36 = vector.load %arg7[%c0_18, %c0_19] : memref<4x1xi32, #tpu.memory_space<vmem>>, vector<4x1xi32>
    tpu.vector_store %arg7[%c0_18, %c0_19], %35 {strides = array<i32>} : memref<4x1xi32, #tpu.memory_space<vmem>>, vector<4x1xi32>,
    %37 = vector.broadcast %11 : vector<4x1xi32> to vector<4x110xi32>
    %38 = arith.cmpi eq, %23, %37 : vector<4x110xi32>
    %cst_20 = arith.constant 0.000000e+00 : f32
    %39 = vector.broadcast %cst_20 : f32 to vector<4x110xf32>
    %40 = arith.select %38, %22, %39 : vector<4x110xi1>, vector<4x110xf32>
    %cst_21 = arith.constant dense<0.000000e+00> : vector<4xf32>
    %41 = vector.multi_reduction <add>, %40, %cst_21 [1] : vector<4x110xf32> to vector<4xf32>
    %42 = vector.shape_cast %41 : vector<4xf32> to vector<4x1xf32>
    %43 = vector.broadcast %25 : vector<4x1xf32> to vector<4x110xf32>
    %44 = arith.subf %22, %43 : vector<4x110xf32>
    %45 = math.exp %44 : vector<4x110xf32>
    %cst_22 = arith.constant dense<0.000000e+00> : vector<4xf32>
    %46 = vector.multi_reduction <add>, %45, %cst_22 [1] : vector<4x110xf32> to vector<4xf32>
    %47 = vector.shape_cast %46 : vector<4xf32> to vector<4x1xf32>
    %48 = math.log %47 : vector<4x1xf32>
    %49 = arith.addf %25, %48 : vector<4x1xf32>
    %50 = arith.subf %49, %42 : vector<4x1xf32>
    %51 = vector.shape_cast %50 : vector<4x1xf32> to vector<1x4x1xf32>
    %cst_23 = arith.constant dense<0.000000e+00> : vector<1xf32>
    %52 = vector.multi_reduction <add>, %51, %cst_23 [1, 2] : vector<1x4x1xf32> to vector<1xf32>
    %53 = vector.shape_cast %52 : vector<1xf32> to vector<1x1x1xf32>
    %54 = vector.extract %53[0, 0, 0] : f32 from vector<1x1x1xf32>
    %cst_24 = arith.constant 4.000000e+00 : f32
    %55 = arith.divf %54, %cst_24 : f32
    %c0_25 = arith.constant 0 : index
    %c0_26 = arith.constant 0 : index
    %56 = memref.load %arg6[%c0_25, %c0_26] : memref<1x1xf32, #tpu.memory_space<smem>>
    memref.store %55, %arg6[%c0_25, %c0_26] : memref<1x1xf32, #tpu.memory_space<smem>>
    return
  }
  func.func @transform_0(%arg0: i32) -> (i32, i32) {
    %c0_i32 = arith.constant 0 : i32
    %c0_i32_0 = arith.constant 0 : i32
    %c0_i32_1 = arith.constant 0 : i32
    return %c0_i32, %c0_i32_0 : i32, i32
  }
  func.func @transform_1(%arg0: i32) -> (i32, i32) {
    %c0_i32 = arith.constant 0 : i32
    %c0_i32_0 = arith.constant 0 : i32
    %c0_i32_1 = arith.constant 0 : i32
    return %c0_i32, %c0_i32_0 : i32, i32
  }
  func.func @transform_2(%arg0: i32) -> (i32, i32) {
    %c0_i32 = arith.constant 0 : i32
    %c0_i32_0 = arith.constant 0 : i32
    %c0_i32_1 = arith.constant 0 : i32
    return %c0_i32, %c0_i32_0 : i32, i32
  }
  func.func @transform_3(%arg0: i32) -> (i32, i32) {
    %c0_i32 = arith.constant 0 : i32
    %c0_i32_0 = arith.constant 0 : i32
    %c0_i32_1 = arith.constant 0 : i32
    return %c0_i32, %c0_i32_0 : i32, i32
  }
  func.func @transform_4(%arg0: i32) -> (i32, i32) {
    %c0_i32 = arith.constant 0 : i32
    %c0_i32_0 = arith.constant 0 : i32
    %c0_i32_1 = arith.constant 0 : i32
    return %c0_i32, %c0_i32_0 : i32, i32
  }
  func.func @transform_5(%arg0: i32) -> (i32, i32) {
    %c0_i32 = arith.constant 0 : i32
    %c0_i32_0 = arith.constant 0 : i32
    %c0_i32_1 = arith.constant 0 : i32
    return %c0_i32, %c0_i32_0 : i32, i32
  }
  func.func @transform_6(%arg0: i32) -> (i32, i32) {
    %c0_i32 = arith.constant 0 : i32
    %c0_i32_0 = arith.constant 0 : i32
    %c0_i32_1 = arith.constant 0 : i32
    return %c0_i32, %c0_i32_0 : i32, i32
  }
}

</mosaic_0001>

<llo_original>
// kernel: tpu_custom_call.1
$region0: #{tpu_custom_call.1}
  #allocation0 [shape = 'u32[]', space=smem, size = 0x4, offset = 0x4, fixed_abs, tag = 'smem constant byte address 0x4 - core index']
  #allocation1 [shape = 'u32[144,128]{1,0:T(1,128)}', space=vmem, size = 0x12000, scoped, tag = 'internal scratch']
  %s0 = inlined_call_operand.vmem [shape: f32[4,1], index: 0, kind: input, shape index: {}]
  %s1 = inlined_call_operand.vmem [shape: f32[4,256], index: 1, kind: input, shape index: {}]
  %s2 = inlined_call_operand.vmem [shape: f32[1,256], index: 2, kind: input, shape index: {}]
  %s3 = inlined_call_operand.vmem [shape: f32[256,110], index: 3, kind: input, shape index: {}]
  %s4 = inlined_call_operand.vmem [shape: f32[256,110], index: 4, kind: input, shape index: {}]
  %s5 = inlined_call_operand.hbm [shape: f32[1,1], index: 5, kind: output, shape index: {0}]
  %s6 = inlined_call_operand.vmem [shape: s32[4,1], index: 6, kind: output, shape index: {1}]
  %7 = xla_tuple %s5, %s6
  %s8 = sld [smem:[#allocation0]]
  $region38: #{tpu_custom_call.1} parent=0
    _
  %s10 = ssub.s32 1, %s8
  %s11 = scalar_select 0, %s10, %s8
  $region1: #{tpu_custom_call.1} parent=0
    #allocation2 [shape = 'u8[512]{0}', space=smem, size = 0x200, scoped, tag = 'output window, operand 0, single buffered']
    #allocation3 [shape = 's32[1]{0}', space=sflag, size = 0x4, scoped, tag = 'scoped memory for tpu_custom_call.1']
    %12 = vsyncpa [#allocation3], 0
    // Predicated region
    $region2: #{tpu_custom_call.1} parent=1 // pred_check
      _
    $region3: #{tpu_custom_call.1} parent=1 // pred_check_branch
      %14 = sbr.rel (0) target = $region5
    $region4: #{tpu_custom_call.1} parent=1 // pred_region
      _
    $region5: #{tpu_custom_call.1} parent=1 // pred_fallthru
      _
    // Predicated region
    $region6: #{tpu_custom_call.1} parent=1 // pred_check
      _
    $region7: #{tpu_custom_call.1} parent=1 // pred_check_branch
      %16 = sbr.rel (0) target = $region9
    $region8: #{tpu_custom_call.1} parent=1 // pred_region
      _
    $region9: #{tpu_custom_call.1} parent=1 // pred_fallthru
      _
    // Predicated region
    $region10: #{tpu_custom_call.1} parent=1 // pred_check
      _
    $region11: #{tpu_custom_call.1} parent=1 // pred_check_branch
      %18 = sbr.rel (0) target = $region13
    $region12: #{tpu_custom_call.1} parent=1 // pred_region
      _
    $region13: #{tpu_custom_call.1} parent=1 // pred_fallthru
      _
    // Predicated region
    $region14: #{tpu_custom_call.1} parent=1 // pred_check
      _
    $region15: #{tpu_custom_call.1} parent=1 // pred_check_branch
      %20 = sbr.rel (0) target = $region17
    $region16: #{tpu_custom_call.1} parent=1 // pred_region
      _
    $region17: #{tpu_custom_call.1} parent=1 // pred_fallthru
      _
    // Predicated region
    $region18: #{tpu_custom_call.1} parent=1 // pred_check
      _
    $region19: #{tpu_custom_call.1} parent=1 // pred_check_branch
      %22 = sbr.rel (0) target = $region21
    $region20: #{tpu_custom_call.1} parent=1 // pred_region
      _
    $region21: #{tpu_custom_call.1} parent=1 // pred_fallthru
      _
    %v23 = vld [vmem:[%s0] sm:$0xf]
    %vm24 = vcmp.ge.f32.partialorder %v23, 150.0
    %v25 = vsel %vm24, 149.0, %v23
    %vm26 = vcmp.le.f32.partialorder %v25, 40.0
    %v27 = vsel %vm26, 40.0, %v25
    %v28 = vsub.f32 %v27, 40.0
    %v29 = vcvt.f32.s32.to.zero.pseudo %v28
    %v30 = vld [vmem:[%s1] sm:$0xff]
    %v31 = vld [vmem:[%s2] sm:$0x3]
    %v33 = vlaneseq
    %v34 = vshrl.u32 %v33, 7
    %v35 = vsub.s32 0, %v34
    %v36 = vrot.slane %v31, %v35
    %v37 = vlaneseq
    %v38 = vshrl.u32 %v37, 7
    %v39 = vsub.s32 1, %v38
    %v40 = vrot.slane %v31, %v39
    %v41 = vcombine.low %v36, %v40
    %v43 = vmul.f32 %v30, %v41
    %v44 = vld [vmem:[%s3] sm:$0xff]
    %v45 = vld [vmem:[%s3 + $0x8] sm:$0xff]
    %v46 = vld [vmem:[%s3 + $0x10] sm:$0xff]
    %v47 = vld [vmem:[%s3 + $0x18] sm:$0xff]
    %v48 = vld [vmem:[%s3 + $0x20] sm:$0xff]
    %v49 = vld [vmem:[%s3 + $0x28] sm:$0xff]
    %v50 = vld [vmem:[%s3 + $0x30] sm:$0xff]
    %v51 = vld [vmem:[%s3 + $0x38] sm:$0xff]
    %v52 = vld [vmem:[%s3 + $0x40] sm:$0xff]
    %v53 = vld [vmem:[%s3 + $0x48] sm:$0xff]
    %v54 = vld [vmem:[%s3 + $0x50] sm:$0xff]
    %v55 = vld [vmem:[%s3 + $0x58] sm:$0xff]
    %v56 = vld [vmem:[%s3 + $0x60] sm:$0xff]
    %v57 = vld [vmem:[%s3 + $0x68] sm:$0xff]
    %v58 = vld [vmem:[%s3 + $0x70] sm:$0xff]
    %v59 = vld [vmem:[%s3 + $0x78] sm:$0xff]
    %v60 = vld [vmem:[%s3 + $0x80] sm:$0xff]
    %v61 = vld [vmem:[%s3 + $0x88] sm:$0xff]
    %v62 = vld [vmem:[%s3 + $0x90] sm:$0xff]
    %v63 = vld [vmem:[%s3 + $0x98] sm:$0xff]
    %v64 = vld [vmem:[%s3 + $0xa0] sm:$0xff]
    %v65 = vld [vmem:[%s3 + $0xa8] sm:$0xff]
    %v66 = vld [vmem:[%s3 + $0xb0] sm:$0xff]
    %v67 = vld [vmem:[%s3 + $0xb8] sm:$0xff]
    %v68 = vld [vmem:[%s3 + $0xc0] sm:$0xff]
    %v69 = vld [vmem:[%s3 + $0xc8] sm:$0xff]
    %v70 = vld [vmem:[%s3 + $0xd0] sm:$0xff]
    %v71 = vld [vmem:[%s3 + $0xd8] sm:$0xff]
    %v72 = vld [vmem:[%s3 + $0xe0] sm:$0xff]
    %v73 = vld [vmem:[%s3 + $0xe8] sm:$0xff]
    %v74 = vld [vmem:[%s3 + $0xf0] sm:$0xff]
    %v75 = vld [vmem:[%s3 + $0xf8] sm:$0xff]
    %v77 = vcombine.high %v43, %v43
    %79 = vmatprep.subr.mxu0 0.0
    %v80 = vand.u32 %v59, 4294901760
    %81 = vmatpush1.msra.mxu0 %v80
    %82 = vmatprep.subr.mxu0 0.0
    %v83 = vand.u32 %v58, 4294901760
    %84 = vmatpush1.msra.mxu0 %v83
    %85 = vmatprep.subr.mxu0 0.0
    %v86 = vand.u32 %v57, 4294901760
    %87 = vmatpush1.msra.mxu0 %v86
    %88 = vmatprep.subr.mxu0 0.0
    %v89 = vand.u32 %v56, 4294901760
    %90 = vmatpush1.msra.mxu0 %v89
    %91 = vmatprep.subr.mxu0 0.0
    %v92 = vand.u32 %v55, 4294901760
    %93 = vmatpush1.msra.mxu0 %v92
    %94 = vmatprep.subr.mxu0 0.0
    %v95 = vand.u32 %v54, 4294901760
    %96 = vmatpush1.msra.mxu0 %v95
    %97 = vmatprep.subr.mxu0 0.0
    %v98 = vand.u32 %v53, 4294901760
    %99 = vmatpush1.msra.mxu0 %v98
    %100 = vmatprep.subr.mxu0 0.0
    %v101 = vand.u32 %v52, 4294901760
    %102 = vmatpush1.msra.mxu0 %v101
    %103 = vmatprep.subr.mxu0 0.0
    %v104 = vand.u32 %v51, 4294901760
    %105 = vmatpush1.msra.mxu0 %v104
    %106 = vmatprep.subr.mxu0 0.0
    %v107 = vand.u32 %v50, 4294901760
    %108 = vmatpush1.msra.mxu0 %v107
    %109 = vmatprep.subr.mxu0 0.0
    %v110 = vand.u32 %v49, 4294901760
    %111 = vmatpush1.msra.mxu0 %v110
    %112 = vmatprep.subr.mxu0 0.0
    %v113 = vand.u32 %v48, 4294901760
    %114 = vmatpush1.msra.mxu0 %v113
    %115 = vmatprep.subr.mxu0 0.0
    %v116 = vand.u32 %v47, 4294901760
    %117 = vmatpush1.msra.mxu0 %v116
    %118 = vmatprep.subr.mxu0 0.0
    %v119 = vand.u32 %v46, 4294901760
    %120 = vmatpush1.msra.mxu0 %v119
    %121 = vmatprep.subr.mxu0 0.0
    %v122 = vand.u32 %v45, 4294901760
    %123 = vmatpush1.msra.mxu0 %v122
    %124 = vmatprep.subr.mxu0 0.0
    %v125 = vand.u32 %v44, 4294901760
    %126 = vmatpush1.msra.mxu0 %v125
    %127 = vmatprep.subr.mxu0 0.0
    %v128 = vand.u32 %v75, 4294901760
    %129 = vmatpush2.msra.mxu0 %v128
    %130 = vmatprep.subr.mxu0 0.0
    %v131 = vand.u32 %v74, 4294901760
    %132 = vmatpush2.msra.mxu0 %v131
    %133 = vmatprep.subr.mxu0 0.0
    %v134 = vand.u32 %v73, 4294901760
    %135 = vmatpush2.msra.mxu0 %v134
    %136 = vmatprep.subr.mxu0 0.0
    %v137 = vand.u32 %v72, 4294901760
    %138 = vmatpush2.msra.mxu0 %v137
    %139 = vmatprep.subr.mxu0 0.0
    %v140 = vand.u32 %v71, 4294901760
    %141 = vmatpush2.msra.mxu0 %v140
    %142 = vmatprep.subr.mxu0 0.0
    %v143 = vand.u32 %v70, 4294901760
    %144 = vmatpush2.msra.mxu0 %v143
    %145 = vmatprep.subr.mxu0 0.0
    %v146 = vand.u32 %v69, 4294901760
    %147 = vmatpush2.msra.mxu0 %v146
    %148 = vmatprep.subr.mxu0 0.0
    %v149 = vand.u32 %v68, 4294901760
    %150 = vmatpush2.msra.mxu0 %v149
    %151 = vmatprep.subr.mxu0 0.0
    %v152 = vand.u32 %v67, 4294901760
    %153 = vmatpush2.msra.mxu0 %v152
    %154 = vmatprep.subr.mxu0 0.0
    %v155 = vand.u32 %v66, 4294901760
    %156 = vmatpush2.msra.mxu0 %v155
    %157 = vmatprep.subr.mxu0 0.0
    %v158 = vand.u32 %v65, 4294901760
    %159 = vmatpush2.msra.mxu0 %v158
    %160 = vmatprep.subr.mxu0 0.0
    %v161 = vand.u32 %v64, 4294901760
    %162 = vmatpush2.msra.mxu0 %v161
    %163 = vmatprep.subr.mxu0 0.0
    %v164 = vand.u32 %v63, 4294901760
    %165 = vmatpush2.msra.mxu0 %v164
    %166 = vmatprep.subr.mxu0 0.0
    %v167 = vand.u32 %v62, 4294901760
    %168 = vmatpush2.msra.mxu0 %v167
    %169 = vmatprep.subr.mxu0 0.0
    %v170 = vand.u32 %v61, 4294901760
    %171 = vmatpush2.msra.mxu0 %v170
    %172 = vmatprep.subr.mxu0 0.0
    %v173 = vand.u32 %v60, 4294901760
    %174 = vmatpush2.msra.mxu0 %v173
    %v175 = vand.u32 %v77, 4294901760
    %v176 = vsub.f32 %v77, %v175
    %v177 = vand.u32 %v176, 4294901760
    %v178 = vsub.f32 %v176, %v177
    %v179 = vand.u32 %v178, 4294901760
    %180 = vmatprep.mubr.f32.mxu0 %v179
    %v181 = vand.u32 %v43, 4294901760
    %v182 = vsub.f32 %v43, %v181
    %v183 = vand.u32 %v182, 4294901760
    %v184 = vsub.f32 %v182, %v183
    %v185 = vand.u32 %v184, 4294901760
    %186 = vmatmul.mubr.f32.gmra.mxu0 %v185
    %v187 = vpop.f32.mrf.mxu0
    %v188 = vadd.f32 0.0, %v187
    %v189 = vpop.f32.mrf.mxu0
    %190 = vdwg.mxu0
    %191 = vmatprep.subr.mxu0 0.0
    %v192 = vand.u32 %v59, 4294901760
    %v193 = vsub.f32 %v59, %v192
    %v194 = vand.u32 %v193, 4294901760
    %v195 = vsub.f32 %v193, %v194
    %v196 = vand.u32 %v195, 4294901760
    %197 = vmatpush1.msra.mxu0 %v196
    %198 = vmatprep.subr.mxu0 0.0
    %v199 = vand.u32 %v58, 4294901760
    %v200 = vsub.f32 %v58, %v199
    %v201 = vand.u32 %v200, 4294901760
    %v202 = vsub.f32 %v200, %v201
    %v203 = vand.u32 %v202, 4294901760
    %204 = vmatpush1.msra.mxu0 %v203
    %205 = vmatprep.subr.mxu0 0.0
    %v206 = vand.u32 %v57, 4294901760
    %v207 = vsub.f32 %v57, %v206
    %v208 = vand.u32 %v207, 4294901760
    %v209 = vsub.f32 %v207, %v208
    %v210 = vand.u32 %v209, 4294901760
    %211 = vmatpush1.msra.mxu0 %v210
    %212 = vmatprep.subr.mxu0 0.0
    %v213 = vand.u32 %v56, 4294901760
    %v214 = vsub.f32 %v56, %v213
    %v215 = vand.u32 %v214, 4294901760
    %v216 = vsub.f32 %v214, %v215
    %v217 = vand.u32 %v216, 4294901760
    %218 = vmatpush1.msra.mxu0 %v217
    %219 = vmatprep.subr.mxu0 0.0
    %v220 = vand.u32 %v55, 4294901760
    %v221 = vsub.f32 %v55, %v220
    %v222 = vand.u32 %v221, 4294901760
    %v223 = vsub.f32 %v221, %v222
    %v224 = vand.u32 %v223, 4294901760
    %225 = vmatpush1.msra.mxu0 %v224
    %226 = vmatprep.subr.mxu0 0.0
    %v227 = vand.u32 %v54, 4294901760
    %v228 = vsub.f32 %v54, %v227
    %v229 = vand.u32 %v228, 4294901760
    %v230 = vsub.f32 %v228, %v229
    %v231 = vand.u32 %v230, 4294901760
    %232 = vmatpush1.msra.mxu0 %v231
    %233 = vmatprep.subr.mxu0 0.0
    %v234 = vand.u32 %v53, 4294901760
    %v235 = vsub.f32 %v53, %v234
    %v236 = vand.u32 %v235, 4294901760
    %v237 = vsub.f32 %v235, %v236
    %v238 = vand.u32 %v237, 4294901760
    %239 = vmatpush1.msra.mxu0 %v238
    %240 = vmatprep.subr.mxu0 0.0
    %v241 = vand.u32 %v52, 4294901760
    %v242 = vsub.f32 %v52, %v241
    %v243 = vand.u32 %v242, 4294901760
    %v244 = vsub.f32 %v242, %v243
    %v245 = vand.u32 %v244, 4294901760
    %246 = vmatpush1.msra.mxu0 %v245
    %247 = vmatprep.subr.mxu0 0.0
    %v248 = vand.u32 %v51, 4294901760
    %v249 = vsub.f32 %v51, %v248
    %v250 = vand.u32 %v249, 4294901760
    %v251 = vsub.f32 %v249, %v250
    %v252 = vand.u32 %v251, 4294901760
    %253 = vmatpush1.msra.mxu0 %v252
    %254 = vmatprep.subr.mxu0 0.0
    %v255 = vand.u32 %v50, 4294901760
    %v256 = vsub.f32 %v50, %v255
    %v257 = vand.u32 %v256, 4294901760
    %v258 = vsub.f32 %v256, %v257
    %v259 = vand.u32 %v258, 4294901760
    %260 = vmatpush1.msra.mxu0 %v259
    %261 = vmatprep.subr.mxu0 0.0
    %v262 = vand.u32 %v49, 4294901760
    %v263 = vsub.f32 %v49, %v262
    %v264 = vand.u32 %v263, 4294901760
    %v265 = vsub.f32 %v263, %v264
    %v266 = vand.u32 %v265, 4294901760
    %267 = vmatpush1.msra.mxu0 %v266
    %268 = vmatprep.subr.mxu0 0.0
    %v269 = vand.u32 %v48, 4294901760
    %v270 = vsub.f32 %v48, %v269
    %v271 = vand.u32 %v270, 4294901760
    %v272 = vsub.f32 %v270, %v271
    %v273 = vand.u32 %v272, 4294901760
    %274 = vmatpush1.msra.mxu0 %v273
    %275 = vmatprep.subr.mxu0 0.0
    %v276 = vand.u32 %v47, 4294901760
    %v277 = vsub.f32 %v47, %v276
    %v278 = vand.u32 %v277, 4294901760
    %v279 = vsub.f32 %v277, %v278
    %v280 = vand.u32 %v279, 4294901760
    %281 = vmatpush1.msra.mxu0 %v280
    %282 = vmatprep.subr.mxu0 0.0
    %v283 = vand.u32 %v46, 4294901760
    %v284 = vsub.f32 %v46, %v283
    %v285 = vand.u32 %v284, 4294901760
    %v286 = vsub.f32 %v284, %v285
    %v287 = vand.u32 %v286, 4294901760
    %288 = vmatpush1.msra.mxu0 %v287
    %289 = vmatprep.subr.mxu0 0.0
    %v290 = vand.u32 %v45, 4294901760
    %v291 = vsub.f32 %v45, %v290
    %v292 = vand.u32 %v291, 4294901760
    %v293 = vsub.f32 %v291, %v292
    %v294 = vand.u32 %v293, 4294901760
    %295 = vmatpush1.msra.mxu0 %v294
    %296 = vmatprep.subr.mxu0 0.0
    %v297 = vand.u32 %v44, 4294901760
    %v298 = vsub.f32 %v44, %v297
    %v299 = vand.u32 %v298, 4294901760
    %v300 = vsub.f32 %v298, %v299
    %v301 = vand.u32 %v300, 4294901760
    %302 = vmatpush1.msra.mxu0 %v301
    %303 = vmatprep.subr.mxu0 0.0
    %v304 = vand.u32 %v75, 4294901760
    %v305 = vsub.f32 %v75, %v304
    %v306 = vand.u32 %v305, 4294901760
    %v307 = vsub.f32 %v305, %v306
    %v308 = vand.u32 %v307, 4294901760
    %309 = vmatpush2.msra.mxu0 %v308
    %310 = vmatprep.subr.mxu0 0.0
    %v311 = vand.u32 %v74, 4294901760
    %v312 = vsub.f32 %v74, %v311
    %v313 = vand.u32 %v312, 4294901760
    %v314 = vsub.f32 %v312, %v313
    %v315 = vand.u32 %v314, 4294901760
    %316 = vmatpush2.msra.mxu0 %v315
    %317 = vmatprep.subr.mxu0 0.0
    %v318 = vand.u32 %v73, 4294901760
    %v319 = vsub.f32 %v73, %v318
    %v320 = vand.u32 %v319, 4294901760
    %v321 = vsub.f32 %v319, %v320
    %v322 = vand.u32 %v321, 4294901760
    %323 = vmatpush2.msra.mxu0 %v322
    %324 = vmatprep.subr.mxu0 0.0
    %v325 = vand.u32 %v72, 4294901760
    %v326 = vsub.f32 %v72, %v325
    %v327 = vand.u32 %v326, 4294901760
    %v328 = vsub.f32 %v326, %v327
    %v329 = vand.u32 %v328, 4294901760
    %330 = vmatpush2.msra.mxu0 %v329
    %331 = vmatprep.subr.mxu0 0.0
    %v332 = vand.u32 %v71, 4294901760
    %v333 = vsub.f32 %v71, %v332
    %v334 = vand.u32 %v333, 4294901760
    %v335 = vsub.f32 %v333, %v334
    %v336 = vand.u32 %v335, 4294901760
    %337 = vmatpush2.msra.mxu0 %v336
    %338 = vmatprep.subr.mxu0 0.0
    %v339 = vand.u32 %v70, 4294901760
    %v340 = vsub.f32 %v70, %v339
    %v341 = vand.u32 %v340, 4294901760
    %v342 = vsub.f32 %v340, %v341
    %v343 = vand.u32 %v342, 4294901760
    %344 = vmatpush2.msra.mxu0 %v343
    %345 = vmatprep.subr.mxu0 0.0
    %v346 = vand.u32 %v69, 4294901760
    %v347 = vsub.f32 %v69, %v346
    %v348 = vand.u32 %v347, 4294901760
    %v349 = vsub.f32 %v347, %v348
    %v350 = vand.u32 %v349, 4294901760
    %351 = vmatpush2.msra.mxu0 %v350
    %352 = vmatprep.subr.mxu0 0.0
    %v353 = vand.u32 %v68, 4294901760
    %v354 = vsub.f32 %v68, %v353
    %v355 = vand.u32 %v354, 4294901760
    %v356 = vsub.f32 %v354, %v355
    %v357 = vand.u32 %v356, 4294901760
    %358 = vmatpush2.msra.mxu0 %v357
    %359 = vmatprep.subr.mxu0 0.0
    %v360 = vand.u32 %v67, 4294901760
    %v361 = vsub.f32 %v67, %v360
    %v362 = vand.u32 %v361, 4294901760
    %v363 = vsub.f32 %v361, %v362
    %v364 = vand.u32 %v363, 4294901760
    %365 = vmatpush2.msra.mxu0 %v364
    %366 = vmatprep.subr.mxu0 0.0
    %v367 = vand.u32 %v66, 4294901760
    %v368 = vsub.f32 %v66, %v367
    %v369 = vand.u32 %v368, 4294901760
    %v370 = vsub.f32 %v368, %v369
    %v371 = vand.u32 %v370, 4294901760
    %372 = vmatpush2.msra.mxu0 %v371
    %373 = vmatprep.subr.mxu0 0.0
    %v374 = vand.u32 %v65, 4294901760
    %v375 = vsub.f32 %v65, %v374
    %v376 = vand.u32 %v375, 4294901760
    %v377 = vsub.f32 %v375, %v376
    %v378 = vand.u32 %v377, 4294901760
    %379 = vmatpush2.msra.mxu0 %v378
    %380 = vmatprep.subr.mxu0 0.0
    %v381 = vand.u32 %v64, 4294901760
    %v382 = vsub.f32 %v64, %v381
    %v383 = vand.u32 %v382, 4294901760
    %v384 = vsub.f32 %v382, %v383
    %v385 = vand.u32 %v384, 4294901760
    %386 = vmatpush2.msra.mxu0 %v385
    %387 = vmatprep.subr.mxu0 0.0
    %v388 = vand.u32 %v63, 4294901760
    %v389 = vsub.f32 %v63, %v388
    %v390 = vand.u32 %v389, 4294901760
    %v391 = vsub.f32 %v389, %v390
    %v392 = vand.u32 %v391, 4294901760
    %393 = vmatpush2.msra.mxu0 %v392
    %394 = vmatprep.subr.mxu0 0.0
    %v395 = vand.u32 %v62, 4294901760
    %v396 = vsub.f32 %v62, %v395
    %v397 = vand.u32 %v396, 4294901760
    %v398 = vsub.f32 %v396, %v397
    %v399 = vand.u32 %v398, 4294901760
    %400 = vmatpush2.msra.mxu0 %v399
    %401 = vmatprep.subr.mxu0 0.0
    %v402 = vand.u32 %v61, 4294901760
    %v403 = vsub.f32 %v61, %v402
    %v404 = vand.u32 %v403, 4294901760
    %v405 = vsub.f32 %v403, %v404
    %v406 = vand.u32 %v405, 4294901760
    %407 = vmatpush2.msra.mxu0 %v406
    %408 = vmatprep.subr.mxu0 0.0
    %v409 = vand.u32 %v60, 4294901760
    %v410 = vsub.f32 %v60, %v409
    %v411 = vand.u32 %v410, 4294901760
    %v412 = vsub.f32 %v410, %v411
    %v413 = vand.u32 %v412, 4294901760
    %414 = vmatpush2.msra.mxu0 %v413
    %v415 = vand.u32 %v77, 4294901760
    %416 = vmatprep.mubr.f32.mxu0 %v415
    %v417 = vand.u32 %v43, 4294901760
    %418 = vmatmul.mubr.f32.gmra.mxu0 %v417
    %v419 = vpop.f32.mrf.mxu0
    %v420 = vadd.f32 %v188, %v419
    %v421 = vpop.f32.mrf.mxu0
    %422 = vdwg.mxu0
    %423 = vmatprep.subr.mxu0 0.0
    %v424 = vand.u32 %v59, 4294901760
    %v425 = vsub.f32 %v59, %v424
    %426 = vmatpush1.msra.mxu0 %v425
    %427 = vmatprep.subr.mxu0 0.0
    %v428 = vand.u32 %v58, 4294901760
    %v429 = vsub.f32 %v58, %v428
    %430 = vmatpush1.msra.mxu0 %v429
    %431 = vmatprep.subr.mxu0 0.0
    %v432 = vand.u32 %v57, 4294901760
    %v433 = vsub.f32 %v57, %v432
    %434 = vmatpush1.msra.mxu0 %v433
    %435 = vmatprep.subr.mxu0 0.0
    %v436 = vand.u32 %v56, 4294901760
    %v437 = vsub.f32 %v56, %v436
    %438 = vmatpush1.msra.mxu0 %v437
    %439 = vmatprep.subr.mxu0 0.0
    %v440 = vand.u32 %v55, 4294901760
    %v441 = vsub.f32 %v55, %v440
    %442 = vmatpush1.msra.mxu0 %v441
    %443 = vmatprep.subr.mxu0 0.0
    %v444 = vand.u32 %v54, 4294901760
    %v445 = vsub.f32 %v54, %v444
    %446 = vmatpush1.msra.mxu0 %v445
    %447 = vmatprep.subr.mxu0 0.0
    %v448 = vand.u32 %v53, 4294901760
    %v449 = vsub.f32 %v53, %v448
    %450 = vmatpush1.msra.mxu0 %v449
    %451 = vmatprep.subr.mxu0 0.0
    %v452 = vand.u32 %v52, 4294901760
    %v453 = vsub.f32 %v52, %v452
    %454 = vmatpush1.msra.mxu0 %v453
    %455 = vmatprep.subr.mxu0 0.0
    %v456 = vand.u32 %v51, 4294901760
    %v457 = vsub.f32 %v51, %v456
    %458 = vmatpush1.msra.mxu0 %v457
    %459 = vmatprep.subr.mxu0 0.0
    %v460 = vand.u32 %v50, 4294901760
    %v461 = vsub.f32 %v50, %v460
    %462 = vmatpush1.msra.mxu0 %v461
    %463 = vmatprep.subr.mxu0 0.0
    %v464 = vand.u32 %v49, 4294901760
    %v465 = vsub.f32 %v49, %v464
    %466 = vmatpush1.msra.mxu0 %v465
    %467 = vmatprep.subr.mxu0 0.0
    %v468 = vand.u32 %v48, 4294901760
    %v469 = vsub.f32 %v48, %v468
    %470 = vmatpush1.msra.mxu0 %v469
    %471 = vmatprep.subr.mxu0 0.0
    %v472 = vand.u32 %v47, 4294901760
    %v473 = vsub.f32 %v47, %v472
    %474 = vmatpush1.msra.mxu0 %v473
    %475 = vmatprep.subr.mxu0 0.0
    %v476 = vand.u32 %v46, 4294901760
    %v477 = vsub.f32 %v46, %v476
    %478 = vmatpush1.msra.mxu0 %v477
    %479 = vmatprep.subr.mxu0 0.0
    %v480 = vand.u32 %v45, 4294901760
    %v481 = vsub.f32 %v45, %v480
    %482 = vmatpush1.msra.mxu0 %v481
    %483 = vmatprep.subr.mxu0 0.0
    %v484 = vand.u32 %v44, 4294901760
    %v485 = vsub.f32 %v44, %v484
    %486 = vmatpush1.msra.mxu0 %v485
    %487 = vmatprep.subr.mxu0 0.0
    %v488 = vand.u32 %v75, 4294901760
    %v489 = vsub.f32 %v75, %v488
    %490 = vmatpush2.msra.mxu0 %v489
    %491 = vmatprep.subr.mxu0 0.0
    %v492 = vand.u32 %v74, 4294901760
    %v493 = vsub.f32 %v74, %v492
    %494 = vmatpush2.msra.mxu0 %v493
    %495 = vmatprep.subr.mxu0 0.0
    %v496 = vand.u32 %v73, 4294901760
    %v497 = vsub.f32 %v73, %v496
    %498 = vmatpush2.msra.mxu0 %v497
    %499 = vmatprep.subr.mxu0 0.0
    %v500 = vand.u32 %v72, 4294901760
    %v501 = vsub.f32 %v72, %v500
    %502 = vmatpush2.msra.mxu0 %v501
    %503 = vmatprep.subr.mxu0 0.0
    %v504 = vand.u32 %v71, 4294901760
    %v505 = vsub.f32 %v71, %v504
    %506 = vmatpush2.msra.mxu0 %v505
    %507 = vmatprep.subr.mxu0 0.0
    %v508 = vand.u32 %v70, 4294901760
    %v509 = vsub.f32 %v70, %v508
    %510 = vmatpush2.msra.mxu0 %v509
    %511 = vmatprep.subr.mxu0 0.0
    %v512 = vand.u32 %v69, 4294901760
    %v513 = vsub.f32 %v69, %v512
    %514 = vmatpush2.msra.mxu0 %v513
    %515 = vmatprep.subr.mxu0 0.0
    %v516 = vand.u32 %v68, 4294901760
    %v517 = vsub.f32 %v68, %v516
    %518 = vmatpush2.msra.mxu0 %v517
    %519 = vmatprep.subr.mxu0 0.0
    %v520 = vand.u32 %v67, 4294901760
    %v521 = vsub.f32 %v67, %v520
    %522 = vmatpush2.msra.mxu0 %v521
    %523 = vmatprep.subr.mxu0 0.0
    %v524 = vand.u32 %v66, 4294901760
    %v525 = vsub.f32 %v66, %v524
    %526 = vmatpush2.msra.mxu0 %v525
    %527 = vmatprep.subr.mxu0 0.0
    %v528 = vand.u32 %v65, 4294901760
    %v529 = vsub.f32 %v65, %v528
    %530 = vmatpush2.msra.mxu0 %v529
    %531 = vmatprep.subr.mxu0 0.0
    %v532 = vand.u32 %v64, 4294901760
    %v533 = vsub.f32 %v64, %v532
    %534 = vmatpush2.msra.mxu0 %v533
    %535 = vmatprep.subr.mxu0 0.0
    %v536 = vand.u32 %v63, 4294901760
    %v537 = vsub.f32 %v63, %v536
    %538 = vmatpush2.msra.mxu0 %v537
    %539 = vmatprep.subr.mxu0 0.0
    %v540 = vand.u32 %v62, 4294901760
    %v541 = vsub.f32 %v62, %v540
    %542 = vmatpush2.msra.mxu0 %v541
    %543 = vmatprep.subr.mxu0 0.0
    %v544 = vand.u32 %v61, 4294901760
    %v545 = vsub.f32 %v61, %v544
    %546 = vmatpush2.msra.mxu0 %v545
    %547 = vmatprep.subr.mxu0 0.0
    %v548 = vand.u32 %v60, 4294901760
    %v549 = vsub.f32 %v60, %v548
    %550 = vmatpush2.msra.mxu0 %v549
    %v551 = vand.u32 %v77, 4294901760
    %v552 = vsub.f32 %v77, %v551
    %553 = vmatprep.mubr.f32.mxu0 %v552
    %v554 = vand.u32 %v43, 4294901760
    %v555 = vsub.f32 %v43, %v554
    %556 = vmatmul.mubr.f32.gmra.mxu0 %v555
    %v557 = vpop.f32.mrf.mxu0
    %v558 = vadd.f32 %v420, %v557
    %v559 = vpop.f32.mrf.mxu0
    %560 = vdwg.mxu0
    %561 = vmatprep.subr.mxu0 0.0
    %v562 = vand.u32 %v59, 4294901760
    %563 = vmatpush1.msra.mxu0 %v562
    %564 = vmatprep.subr.mxu0 0.0
    %v565 = vand.u32 %v58, 4294901760
    %566 = vmatpush1.msra.mxu0 %v565
    %567 = vmatprep.subr.mxu0 0.0
    %v568 = vand.u32 %v57, 4294901760
    %569 = vmatpush1.msra.mxu0 %v568
    %570 = vmatprep.subr.mxu0 0.0
    %v571 = vand.u32 %v56, 4294901760
    %572 = vmatpush1.msra.mxu0 %v571
    %573 = vmatprep.subr.mxu0 0.0
    %v574 = vand.u32 %v55, 4294901760
    %575 = vmatpush1.msra.mxu0 %v574
    %576 = vmatprep.subr.mxu0 0.0
    %v577 = vand.u32 %v54, 4294901760
    %578 = vmatpush1.msra.mxu0 %v577
    %579 = vmatprep.subr.mxu0 0.0
    %v580 = vand.u32 %v53, 4294901760
    %581 = vmatpush1.msra.mxu0 %v580
    %582 = vmatprep.subr.mxu0 0.0
    %v583 = vand.u32 %v52, 4294901760
    %584 = vmatpush1.msra.mxu0 %v583
    %585 = vmatprep.subr.mxu0 0.0
    %v586 = vand.u32 %v51, 4294901760
    %587 = vmatpush1.msra.mxu0 %v586
    %588 = vmatprep.subr.mxu0 0.0
    %v589 = vand.u32 %v50, 4294901760
    %590 = vmatpush1.msra.mxu0 %v589
    %591 = vmatprep.subr.mxu0 0.0
    %v592 = vand.u32 %v49, 4294901760
    %593 = vmatpush1.msra.mxu0 %v592
    %594 = vmatprep.subr.mxu0 0.0
    %v595 = vand.u32 %v48, 4294901760
    %596 = vmatpush1.msra.mxu0 %v595
    %597 = vmatprep.subr.mxu0 0.0
    %v598 = vand.u32 %v47, 4294901760
    %599 = vmatpush1.msra.mxu0 %v598
    %600 = vmatprep.subr.mxu0 0.0
    %v601 = vand.u32 %v46, 4294901760
    %602 = vmatpush1.msra.mxu0 %v601
    %603 = vmatprep.subr.mxu0 0.0
    %v604 = vand.u32 %v45, 4294901760
    %605 = vmatpush1.msra.mxu0 %v604
    %606 = vmatprep.subr.mxu0 0.0
    %v607 = vand.u32 %v44, 4294901760
    %608 = vmatpush1.msra.mxu0 %v607
    %609 = vmatprep.subr.mxu0 0.0
    %v610 = vand.u32 %v75, 4294901760
    %611 = vmatpush2.msra.mxu0 %v610
    %612 = vmatprep.subr.mxu0 0.0
    %v613 = vand.u32 %v74, 4294901760
    %614 = vmatpush2.msra.mxu0 %v613
    %615 = vmatprep.subr.mxu0 0.0
    %v616 = vand.u32 %v73, 4294901760
    %617 = vmatpush2.msra.mxu0 %v616
    %618 = vmatprep.subr.mxu0 0.0
    %v619 = vand.u32 %v72, 4294901760
    %620 = vmatpush2.msra.mxu0 %v619
    %621 = vmatprep.subr.mxu0 0.0
    %v622 = vand.u32 %v71, 4294901760
    %623 = vmatpush2.msra.mxu0 %v622
    %624 = vmatprep.subr.mxu0 0.0
    %v625 = vand.u32 %v70, 4294901760
    %626 = vmatpush2.msra.mxu0 %v625
    %627 = vmatprep.subr.mxu0 0.0
    %v628 = vand.u32 %v69, 4294901760
    %629 = vmatpush2.msra.mxu0 %v628
    %630 = vmatprep.subr.mxu0 0.0
    %v631 = vand.u32 %v68, 4294901760
    %632 = vmatpush2.msra.mxu0 %v631
    %633 = vmatprep.subr.mxu0 0.0
    %v634 = vand.u32 %v67, 4294901760
    %635 = vmatpush2.msra.mxu0 %v634
    %636 = vmatprep.subr.mxu0 0.0
    %v637 = vand.u32 %v66, 4294901760
    %638 = vmatpush2.msra.mxu0 %v637
    %639 = vmatprep.subr.mxu0 0.0
    %v640 = vand.u32 %v65, 4294901760
    %641 = vmatpush2.msra.mxu0 %v640
    %642 = vmatprep.subr.mxu0 0.0
    %v643 = vand.u32 %v64, 4294901760
    %644 = vmatpush2.msra.mxu0 %v643
    %645 = vmatprep.subr.mxu0 0.0
    %v646 = vand.u32 %v63, 4294901760
    %647 = vmatpush2.msra.mxu0 %v646
    %648 = vmatprep.subr.mxu0 0.0
    %v649 = vand.u32 %v62, 4294901760
    %650 = vmatpush2.msra.mxu0 %v649
    %651 = vmatprep.subr.mxu0 0.0
    %v652 = vand.u32 %v61, 4294901760
    %653 = vmatpush2.msra.mxu0 %v652
    %654 = vmatprep.subr.mxu0 0.0
    %v655 = vand.u32 %v60, 4294901760
    %656 = vmatpush2.msra.mxu0 %v655
    %v657 = vand.u32 %v77, 4294901760
    %v658 = vsub.f32 %v77, %v657
    %v659 = vand.u32 %v658, 4294901760
    %660 = vmatprep.mubr.f32.mxu0 %v659
    %v661 = vand.u32 %v43, 4294901760
    %v662 = vsub.f32 %v43, %v661
    %v663 = vand.u32 %v662, 4294901760
    %664 = vmatmul.mubr.f32.gmra.mxu0 %v663
    %v665 = vpop.f32.mrf.mxu0
    %v666 = vadd.f32 %v558, %v665
    %v667 = vpop.f32.mrf.mxu0
    %668 = vdwg.mxu0
    %669 = vmatprep.subr.mxu0 0.0
    %v670 = vand.u32 %v59, 4294901760
    %v671 = vsub.f32 %v59, %v670
    %v672 = vand.u32 %v671, 4294901760
    %673 = vmatpush1.msra.mxu0 %v672
    %674 = vmatprep.subr.mxu0 0.0
    %v675 = vand.u32 %v58, 4294901760
    %v676 = vsub.f32 %v58, %v675
    %v677 = vand.u32 %v676, 4294901760
    %678 = vmatpush1.msra.mxu0 %v677
    %679 = vmatprep.subr.mxu0 0.0
    %v680 = vand.u32 %v57, 4294901760
    %v681 = vsub.f32 %v57, %v680
    %v682 = vand.u32 %v681, 4294901760
    %683 = vmatpush1.msra.mxu0 %v682
    %684 = vmatprep.subr.mxu0 0.0
    %v685 = vand.u32 %v56, 4294901760
    %v686 = vsub.f32 %v56, %v685
    %v687 = vand.u32 %v686, 4294901760
    %688 = vmatpush1.msra.mxu0 %v687
    %689 = vmatprep.subr.mxu0 0.0
    %v690 = vand.u32 %v55, 4294901760
    %v691 = vsub.f32 %v55, %v690
    %v692 = vand.u32 %v691, 4294901760
    %693 = vmatpush1.msra.mxu0 %v692
    %694 = vmatprep.subr.mxu0 0.0
    %v695 = vand.u32 %v54, 4294901760
    %v696 = vsub.f32 %v54, %v695
    %v697 = vand.u32 %v696, 4294901760
    %698 = vmatpush1.msra.mxu0 %v697
    %699 = vmatprep.subr.mxu0 0.0
    %v700 = vand.u32 %v53, 4294901760
    %v701 = vsub.f32 %v53, %v700
    %v702 = vand.u32 %v701, 4294901760
    %703 = vmatpush1.msra.mxu0 %v702
    %704 = vmatprep.subr.mxu0 0.0
    %v705 = vand.u32 %v52, 4294901760
    %v706 = vsub.f32 %v52, %v705
    %v707 = vand.u32 %v706, 4294901760
    %708 = vmatpush1.msra.mxu0 %v707
    %709 = vmatprep.subr.mxu0 0.0
    %v710 = vand.u32 %v51, 4294901760
    %v711 = vsub.f32 %v51, %v710
    %v712 = vand.u32 %v711, 4294901760
    %713 = vmatpush1.msra.mxu0 %v712
    %714 = vmatprep.subr.mxu0 0.0
    %v715 = vand.u32 %v50, 4294901760
    %v716 = vsub.f32 %v50, %v715
    %v717 = vand.u32 %v716, 4294901760
    %718 = vmatpush1.msra.mxu0 %v717
    %719 = vmatprep.subr.mxu0 0.0
    %v720 = vand.u32 %v49, 4294901760
    %v721 = vsub.f32 %v49, %v720
    %v722 = vand.u32 %v721, 4294901760
    %723 = vmatpush1.msra.mxu0 %v722
    %724 = vmatprep.subr.mxu0 0.0
    %v725 = vand.u32 %v48, 4294901760
    %v726 = vsub.f32 %v48, %v725
    %v727 = vand.u32 %v726, 4294901760
    %728 = vmatpush1.msra.mxu0 %v727
    %729 = vmatprep.subr.mxu0 0.0
    %v730 = vand.u32 %v47, 4294901760
    %v731 = vsub.f32 %v47, %v730
    %v732 = vand.u32 %v731, 4294901760
    %733 = vmatpush1.msra.mxu0 %v732
    %734 = vmatprep.subr.mxu0 0.0
    %v735 = vand.u32 %v46, 4294901760
    %v736 = vsub.f32 %v46, %v735
    %v737 = vand.u32 %v736, 4294901760
    %738 = vmatpush1.msra.mxu0 %v737
    %739 = vmatprep.subr.mxu0 0.0
    %v740 = vand.u32 %v45, 4294901760
    %v741 = vsub.f32 %v45, %v740
    %v742 = vand.u32 %v741, 4294901760
    %743 = vmatpush1.msra.mxu0 %v742
    %744 = vmatprep.subr.mxu0 0.0
    %v745 = vand.u32 %v44, 4294901760
    %v746 = vsub.f32 %v44, %v745
    %v747 = vand.u32 %v746, 4294901760
    %748 = vmatpush1.msra.mxu0 %v747
    %749 = vmatprep.subr.mxu0 0.0
    %v750 = vand.u32 %v75, 4294901760
    %v751 = vsub.f32 %v75, %v750
    %v752 = vand.u32 %v751, 4294901760
    %753 = vmatpush2.msra.mxu0 %v752
    %754 = vmatprep.subr.mxu0 0.0
    %v755 = vand.u32 %v74, 4294901760
    %v756 = vsub.f32 %v74, %v755
    %v757 = vand.u32 %v756, 4294901760
    %758 = vmatpush2.msra.mxu0 %v757
    %759 = vmatprep.subr.mxu0 0.0
    %v760 = vand.u32 %v73, 4294901760
    %v761 = vsub.f32 %v73, %v760
    %v762 = vand.u32 %v761, 4294901760
    %763 = vmatpush2.msra.mxu0 %v762
    %764 = vmatprep.subr.mxu0 0.0
    %v765 = vand.u32 %v72, 4294901760
    %v766 = vsub.f32 %v72, %v765
    %v767 = vand.u32 %v766, 4294901760
    %768 = vmatpush2.msra.mxu0 %v767
    %769 = vmatprep.subr.mxu0 0.0
    %v770 = vand.u32 %v71, 4294901760
    %v771 = vsub.f32 %v71, %v770
    %v772 = vand.u32 %v771, 4294901760
    %773 = vmatpush2.msra.mxu0 %v772
    %774 = vmatprep.subr.mxu0 0.0
    %v775 = vand.u32 %v70, 4294901760
    %v776 = vsub.f32 %v70, %v775
    %v777 = vand.u32 %v776, 4294901760
    %778 = vmatpush2.msra.mxu0 %v777
    %779 = vmatprep.subr.mxu0 0.0
    %v780 = vand.u32 %v69, 4294901760
    %v781 = vsub.f32 %v69, %v780
    %v782 = vand.u32 %v781, 4294901760
    %783 = vmatpush2.msra.mxu0 %v782
    %784 = vmatprep.subr.mxu0 0.0
    %v785 = vand.u32 %v68, 4294901760
    %v786 = vsub.f32 %v68, %v785
    %v787 = vand.u32 %v786, 4294901760
    %788 = vmatpush2.msra.mxu0 %v787
    %789 = vmatprep.subr.mxu0 0.0
    %v790 = vand.u32 %v67, 4294901760
    %v791 = vsub.f32 %v67, %v790
    %v792 = vand.u32 %v791, 4294901760
    %793 = vmatpush2.msra.mxu0 %v792
    %794 = vmatprep.subr.mxu0 0.0
    %v795 = vand.u32 %v66, 4294901760
    %v796 = vsub.f32 %v66, %v795
    %v797 = vand.u32 %v796, 4294901760
    %798 = vmatpush2.msra.mxu0 %v797
    %799 = vmatprep.subr.mxu0 0.0
    %v800 = vand.u32 %v65, 4294901760
    %v801 = vsub.f32 %v65, %v800
    %v802 = vand.u32 %v801, 4294901760
    %803 = vmatpush2.msra.mxu0 %v802
    %804 = vmatprep.subr.mxu0 0.0
    %v805 = vand.u32 %v64, 4294901760
    %v806 = vsub.f32 %v64, %v805
    %v807 = vand.u32 %v806, 4294901760
    %808 = vmatpush2.msra.mxu0 %v807
    %809 = vmatprep.subr.mxu0 0.0
    %v810 = vand.u32 %v63, 4294901760
    %v811 = vsub.f32 %v63, %v810
    %v812 = vand.u32 %v811, 4294901760
    %813 = vmatpush2.msra.mxu0 %v812
    %814 = vmatprep.subr.mxu0 0.0
    %v815 = vand.u32 %v62, 4294901760
    %v816 = vsub.f32 %v62, %v815
    %v817 = vand.u32 %v816, 4294901760
    %818 = vmatpush2.msra.mxu0 %v817
    %819 = vmatprep.subr.mxu0 0.0
    %v820 = vand.u32 %v61, 4294901760
    %v821 = vsub.f32 %v61, %v820
    %v822 = vand.u32 %v821, 4294901760
    %823 = vmatpush2.msra.mxu0 %v822
    %824 = vmatprep.subr.mxu0 0.0
    %v825 = vand.u32 %v60, 4294901760
    %v826 = vsub.f32 %v60, %v825
    %v827 = vand.u32 %v826, 4294901760
    %828 = vmatpush2.msra.mxu0 %v827
    %v829 = vand.u32 %v77, 4294901760
    %830 = vmatprep.mubr.f32.mxu0 %v829
    %v831 = vand.u32 %v43, 4294901760
    %832 = vmatmul.mubr.f32.gmra.mxu0 %v831
    %v833 = vpop.f32.mrf.mxu0
    %v834 = vadd.f32 %v666, %v833
    %v835 = vpop.f32.mrf.mxu0
    %836 = vdwg.mxu0
    %837 = vmatprep.subr.mxu0 0.0
    %v838 = vand.u32 %v59, 4294901760
    %839 = vmatpush1.msra.mxu0 %v838
    %840 = vmatprep.subr.mxu0 0.0
    %v841 = vand.u32 %v58, 4294901760
    %842 = vmatpush1.msra.mxu0 %v841
    %843 = vmatprep.subr.mxu0 0.0
    %v844 = vand.u32 %v57, 4294901760
    %845 = vmatpush1.msra.mxu0 %v844
    %846 = vmatprep.subr.mxu0 0.0
    %v847 = vand.u32 %v56, 4294901760
    %848 = vmatpush1.msra.mxu0 %v847
    %849 = vmatprep.subr.mxu0 0.0
    %v850 = vand.u32 %v55, 4294901760
    %851 = vmatpush1.msra.mxu0 %v850
    %852 = vmatprep.subr.mxu0 0.0
    %v853 = vand.u32 %v54, 4294901760
    %854 = vmatpush1.msra.mxu0 %v853
    %855 = vmatprep.subr.mxu0 0.0
    %v856 = vand.u32 %v53, 4294901760
    %857 = vmatpush1.msra.mxu0 %v856
    %858 = vmatprep.subr.mxu0 0.0
    %v859 = vand.u32 %v52, 4294901760
    %860 = vmatpush1.msra.mxu0 %v859
    %861 = vmatprep.subr.mxu0 0.0
    %v862 = vand.u32 %v51, 4294901760
    %863 = vmatpush1.msra.mxu0 %v862
    %864 = vmatprep.subr.mxu0 0.0
    %v865 = vand.u32 %v50, 4294901760
    %866 = vmatpush1.msra.mxu0 %v865
    %867 = vmatprep.subr.mxu0 0.0
    %v868 = vand.u32 %v49, 4294901760
    %869 = vmatpush1.msra.mxu0 %v868
    %870 = vmatprep.subr.mxu0 0.0
    %v871 = vand.u32 %v48, 4294901760
    %872 = vmatpush1.msra.mxu0 %v871
    %873 = vmatprep.subr.mxu0 0.0
    %v874 = vand.u32 %v47, 4294901760
    %875 = vmatpush1.msra.mxu0 %v874
    %876 = vmatprep.subr.mxu0 0.0
    %v877 = vand.u32 %v46, 4294901760
    %878 = vmatpush1.msra.mxu0 %v877
    %879 = vmatprep.subr.mxu0 0.0
    %v880 = vand.u32 %v45, 4294901760
    %881 = vmatpush1.msra.mxu0 %v880
    %882 = vmatprep.subr.mxu0 0.0
    %v883 = vand.u32 %v44, 4294901760
    %884 = vmatpush1.msra.mxu0 %v883
    %885 = vmatprep.subr.mxu0 0.0
    %v886 = vand.u32 %v75, 4294901760
    %887 = vmatpush2.msra.mxu0 %v886
    %888 = vmatprep.subr.mxu0 0.0
    %v889 = vand.u32 %v74, 4294901760
    %890 = vmatpush2.msra.mxu0 %v889
    %891 = vmatprep.subr.mxu0 0.0
    %v892 = vand.u32 %v73, 4294901760
    %893 = vmatpush2.msra.mxu0 %v892
    %894 = vmatprep.subr.mxu0 0.0
    %v895 = vand.u32 %v72, 4294901760
    %896 = vmatpush2.msra.mxu0 %v895
    %897 = vmatprep.subr.mxu0 0.0
    %v898 = vand.u32 %v71, 4294901760
    %899 = vmatpush2.msra.mxu0 %v898
    %900 = vmatprep.subr.mxu0 0.0
    %v901 = vand.u32 %v70, 4294901760
    %902 = vmatpush2.msra.mxu0 %v901
    %903 = vmatprep.subr.mxu0 0.0
    %v904 = vand.u32 %v69, 4294901760
    %905 = vmatpush2.msra.mxu0 %v904
    %906 = vmatprep.subr.mxu0 0.0
    %v907 = vand.u32 %v68, 4294901760
    %908 = vmatpush2.msra.mxu0 %v907
    %909 = vmatprep.subr.mxu0 0.0
    %v910 = vand.u32 %v67, 4294901760
    %911 = vmatpush2.msra.mxu0 %v910
    %912 = vmatprep.subr.mxu0 0.0
    %v913 = vand.u32 %v66, 4294901760
    %914 = vmatpush2.msra.mxu0 %v913
    %915 = vmatprep.subr.mxu0 0.0
    %v916 = vand.u32 %v65, 4294901760
    %917 = vmatpush2.msra.mxu0 %v916
    %918 = vmatprep.subr.mxu0 0.0
    %v919 = vand.u32 %v64, 4294901760
    %920 = vmatpush2.msra.mxu0 %v919
    %921 = vmatprep.subr.mxu0 0.0
    %v922 = vand.u32 %v63, 4294901760
    %923 = vmatpush2.msra.mxu0 %v922
    %924 = vmatprep.subr.mxu0 0.0
    %v925 = vand.u32 %v62, 4294901760
    %926 = vmatpush2.msra.mxu0 %v925
    %927 = vmatprep.subr.mxu0 0.0
    %v928 = vand.u32 %v61, 4294901760
    %929 = vmatpush2.msra.mxu0 %v928
    %930 = vmatprep.subr.mxu0 0.0
    %v931 = vand.u32 %v60, 4294901760
    %932 = vmatpush2.msra.mxu0 %v931
    %v933 = vand.u32 %v77, 4294901760
    %934 = vmatprep.mubr.f32.mxu0 %v933
    %v935 = vand.u32 %v43, 4294901760
    %936 = vmatmul.mubr.f32.gmra.mxu0 %v935
    %v937 = vpop.f32.mrf.mxu0
    %v938 = vadd.f32 %v834, %v937
    %v939 = vpop.f32.mrf.mxu0
    %940 = vdwg.mxu0
    %v941 = vld [vmem:[%s4] sm:$0xff]
    %v942 = vld [vmem:[%s4 + $0x8] sm:$0xff]
    %v943 = vld [vmem:[%s4 + $0x10] sm:$0xff]
    %v944 = vld [vmem:[%s4 + $0x18] sm:$0xff]
    %v945 = vld [vmem:[%s4 + $0x20] sm:$0xff]
    %v946 = vld [vmem:[%s4 + $0x28] sm:$0xff]
    %v947 = vld [vmem:[%s4 + $0x30] sm:$0xff]
    %v948 = vld [vmem:[%s4 + $0x38] sm:$0xff]
    %v949 = vld [vmem:[%s4 + $0x40] sm:$0xff]
    %v950 = vld [vmem:[%s4 + $0x48] sm:$0xff]
    %v951 = vld [vmem:[%s4 + $0x50] sm:$0xff]
    %v952 = vld [vmem:[%s4 + $0x58] sm:$0xff]
    %v953 = vld [vmem:[%s4 + $0x60] sm:$0xff]
    %v954 = vld [vmem:[%s4 + $0x68] sm:$0xff]
    %v955 = vld [vmem:[%s4 + $0x70] sm:$0xff]
    %v956 = vld [vmem:[%s4 + $0x78] sm:$0xff]
    %v957 = vld [vmem:[%s4 + $0x80] sm:$0xff]
    %v958 = vld [vmem:[%s4 + $0x88] sm:$0xff]
    %v959 = vld [vmem:[%s4 + $0x90] sm:$0xff]
    %v960 = vld [vmem:[%s4 + $0x98] sm:$0xff]
    %v961 = vld [vmem:[%s4 + $0xa0] sm:$0xff]
    %v962 = vld [vmem:[%s4 + $0xa8] sm:$0xff]
    %v963 = vld [vmem:[%s4 + $0xb0] sm:$0xff]
    %v964 = vld [vmem:[%s4 + $0xb8] sm:$0xff]
    %v965 = vld [vmem:[%s4 + $0xc0] sm:$0xff]
    %v966 = vld [vmem:[%s4 + $0xc8] sm:$0xff]
    %v967 = vld [vmem:[%s4 + $0xd0] sm:$0xff]
    %v968 = vld [vmem:[%s4 + $0xd8] sm:$0xff]
    %v969 = vld [vmem:[%s4 + $0xe0] sm:$0xff]
    %v970 = vld [vmem:[%s4 + $0xe8] sm:$0xff]
    %v971 = vld [vmem:[%s4 + $0xf0] sm:$0xff]
    %v972 = vld [vmem:[%s4 + $0xf8] sm:$0xff]
    %973 = vmatprep.subr.mxu0 0.0
    %v974 = vand.u32 %v956, 4294901760
    %975 = vmatpush1.msra.mxu0 %v974
    %976 = vmatprep.subr.mxu0 0.0
    %v977 = vand.u32 %v955, 4294901760
    %978 = vmatpush1.msra.mxu0 %v977
    %979 = vmatprep.subr.mxu0 0.0
    %v980 = vand.u32 %v954, 4294901760
    %981 = vmatpush1.msra.mxu0 %v980
    %982 = vmatprep.subr.mxu0 0.0
    %v983 = vand.u32 %v953, 4294901760
    %984 = vmatpush1.msra.mxu0 %v983
    %985 = vmatprep.subr.mxu0 0.0
    %v986 = vand.u32 %v952, 4294901760
    %987 = vmatpush1.msra.mxu0 %v986
    %988 = vmatprep.subr.mxu0 0.0
    %v989 = vand.u32 %v951, 4294901760
    %990 = vmatpush1.msra.mxu0 %v989
    %991 = vmatprep.subr.mxu0 0.0
    %v992 = vand.u32 %v950, 4294901760
    %993 = vmatpush1.msra.mxu0 %v992
    %994 = vmatprep.subr.mxu0 0.0
    %v995 = vand.u32 %v949, 4294901760
    %996 = vmatpush1.msra.mxu0 %v995
    %997 = vmatprep.subr.mxu0 0.0
    %v998 = vand.u32 %v948, 4294901760
    %999 = vmatpush1.msra.mxu0 %v998
    %1000 = vmatprep.subr.mxu0 0.0
    %v1001 = vand.u32 %v947, 4294901760
    %1002 = vmatpush1.msra.mxu0 %v1001
    %1003 = vmatprep.subr.mxu0 0.0
    %v1004 = vand.u32 %v946, 4294901760
    %1005 = vmatpush1.msra.mxu0 %v1004
    %1006 = vmatprep.subr.mxu0 0.0
    %v1007 = vand.u32 %v945, 4294901760
    %1008 = vmatpush1.msra.mxu0 %v1007
    %1009 = vmatprep.subr.mxu0 0.0
    %v1010 = vand.u32 %v944, 4294901760
    %1011 = vmatpush1.msra.mxu0 %v1010
    %1012 = vmatprep.subr.mxu0 0.0
    %v1013 = vand.u32 %v943, 4294901760
    %1014 = vmatpush1.msra.mxu0 %v1013
    %1015 = vmatprep.subr.mxu0 0.0
    %v1016 = vand.u32 %v942, 4294901760
    %1017 = vmatpush1.msra.mxu0 %v1016
    %1018 = vmatprep.subr.mxu0 0.0
    %v1019 = vand.u32 %v941, 4294901760
    %1020 = vmatpush1.msra.mxu0 %v1019
    %1021 = vmatprep.subr.mxu0 0.0
    %v1022 = vand.u32 %v972, 4294901760
    %1023 = vmatpush2.msra.mxu0 %v1022
    %1024 = vmatprep.subr.mxu0 0.0
    %v1025 = vand.u32 %v971, 4294901760
    %1026 = vmatpush2.msra.mxu0 %v1025
    %1027 = vmatprep.subr.mxu0 0.0
    %v1028 = vand.u32 %v970, 4294901760
    %1029 = vmatpush2.msra.mxu0 %v1028
    %1030 = vmatprep.subr.mxu0 0.0
    %v1031 = vand.u32 %v969, 4294901760
    %1032 = vmatpush2.msra.mxu0 %v1031
    %1033 = vmatprep.subr.mxu0 0.0
    %v1034 = vand.u32 %v968, 4294901760
    %1035 = vmatpush2.msra.mxu0 %v1034
    %1036 = vmatprep.subr.mxu0 0.0
    %v1037 = vand.u32 %v967, 4294901760
    %1038 = vmatpush2.msra.mxu0 %v1037
    %1039 = vmatprep.subr.mxu0 0.0
    %v1040 = vand.u32 %v966, 4294901760
    %1041 = vmatpush2.msra.mxu0 %v1040
    %1042 = vmatprep.subr.mxu0 0.0
    %v1043 = vand.u32 %v965, 4294901760
    %1044 = vmatpush2.msra.mxu0 %v1043
    %1045 = vmatprep.subr.mxu0 0.0
    %v1046 = vand.u32 %v964, 4294901760
    %1047 = vmatpush2.msra.mxu0 %v1046
    %1048 = vmatprep.subr.mxu0 0.0
    %v1049 = vand.u32 %v963, 4294901760
    %1050 = vmatpush2.msra.mxu0 %v1049
    %1051 = vmatprep.subr.mxu0 0.0
    %v1052 = vand.u32 %v962, 4294901760
    %1053 = vmatpush2.msra.mxu0 %v1052
    %1054 = vmatprep.subr.mxu0 0.0
    %v1055 = vand.u32 %v961, 4294901760
    %1056 = vmatpush2.msra.mxu0 %v1055
    %1057 = vmatprep.subr.mxu0 0.0
    %v1058 = vand.u32 %v960, 4294901760
    %1059 = vmatpush2.msra.mxu0 %v1058
    %1060 = vmatprep.subr.mxu0 0.0
    %v1061 = vand.u32 %v959, 4294901760
    %1062 = vmatpush2.msra.mxu0 %v1061
    %1063 = vmatprep.subr.mxu0 0.0
    %v1064 = vand.u32 %v958, 4294901760
    %1065 = vmatpush2.msra.mxu0 %v1064
    %1066 = vmatprep.subr.mxu0 0.0
    %v1067 = vand.u32 %v957, 4294901760
    %1068 = vmatpush2.msra.mxu0 %v1067
    %v1069 = vand.u32 %v77, 4294901760
    %v1070 = vsub.f32 %v77, %v1069
    %v1071 = vand.u32 %v1070, 4294901760
    %v1072 = vsub.f32 %v1070, %v1071
    %v1073 = vand.u32 %v1072, 4294901760
    %1074 = vmatprep.mubr.f32.mxu0 %v1073
    %v1075 = vand.u32 %v43, 4294901760
    %v1076 = vsub.f32 %v43, %v1075
    %v1077 = vand.u32 %v1076, 4294901760
    %v1078 = vsub.f32 %v1076, %v1077
    %v1079 = vand.u32 %v1078, 4294901760
    %1080 = vmatmul.mubr.f32.gmra.mxu0 %v1079
    %v1081 = vpop.f32.mrf.mxu0
    %v1082 = vadd.f32 0.0, %v1081
    %v1083 = vpop.f32.mrf.mxu0
    %1084 = vdwg.mxu0
    %1085 = vmatprep.subr.mxu0 0.0
    %v1086 = vand.u32 %v956, 4294901760
    %v1087 = vsub.f32 %v956, %v1086
    %v1088 = vand.u32 %v1087, 4294901760
    %v1089 = vsub.f32 %v1087, %v1088
    %v1090 = vand.u32 %v1089, 4294901760
    %1091 = vmatpush1.msra.mxu0 %v1090
    %1092 = vmatprep.subr.mxu0 0.0
    %v1093 = vand.u32 %v955, 4294901760
    %v1094 = vsub.f32 %v955, %v1093
    %v1095 = vand.u32 %v1094, 4294901760
    %v1096 = vsub.f32 %v1094, %v1095
    %v1097 = vand.u32 %v1096, 4294901760
    %1098 = vmatpush1.msra.mxu0 %v1097
    %1099 = vmatprep.subr.mxu0 0.0
    %v1100 = vand.u32 %v954, 4294901760
    %v1101 = vsub.f32 %v954, %v1100
    %v1102 = vand.u32 %v1101, 4294901760
    %v1103 = vsub.f32 %v1101, %v1102
    %v1104 = vand.u32 %v1103, 4294901760
    %1105 = vmatpush1.msra.mxu0 %v1104
    %1106 = vmatprep.subr.mxu0 0.0
    %v1107 = vand.u32 %v953, 4294901760
    %v1108 = vsub.f32 %v953, %v1107
    %v1109 = vand.u32 %v1108, 4294901760
    %v1110 = vsub.f32 %v1108, %v1109
    %v1111 = vand.u32 %v1110, 4294901760
    %1112 = vmatpush1.msra.mxu0 %v1111
    %1113 = vmatprep.subr.mxu0 0.0
    %v1114 = vand.u32 %v952, 4294901760
    %v1115 = vsub.f32 %v952, %v1114
    %v1116 = vand.u32 %v1115, 4294901760
    %v1117 = vsub.f32 %v1115, %v1116
    %v1118 = vand.u32 %v1117, 4294901760
    %1119 = vmatpush1.msra.mxu0 %v1118
    %1120 = vmatprep.subr.mxu0 0.0
    %v1121 = vand.u32 %v951, 4294901760
    %v1122 = vsub.f32 %v951, %v1121
    %v1123 = vand.u32 %v1122, 4294901760
    %v1124 = vsub.f32 %v1122, %v1123
    %v1125 = vand.u32 %v1124, 4294901760
    %1126 = vmatpush1.msra.mxu0 %v1125
    %1127 = vmatprep.subr.mxu0 0.0
    %v1128 = vand.u32 %v950, 4294901760
    %v1129 = vsub.f32 %v950, %v1128
    %v1130 = vand.u32 %v1129, 4294901760
    %v1131 = vsub.f32 %v1129, %v1130
    %v1132 = vand.u32 %v1131, 4294901760
    %1133 = vmatpush1.msra.mxu0 %v1132
    %1134 = vmatprep.subr.mxu0 0.0
    %v1135 = vand.u32 %v949, 4294901760
    %v1136 = vsub.f32 %v949, %v1135
    %v1137 = vand.u32 %v1136, 4294901760
    %v1138 = vsub.f32 %v1136, %v1137
    %v1139 = vand.u32 %v1138, 4294901760
    %1140 = vmatpush1.msra.mxu0 %v1139
    %1141 = vmatprep.subr.mxu0 0.0
    %v1142 = vand.u32 %v948, 4294901760
    %v1143 = vsub.f32 %v948, %v1142
    %v1144 = vand.u32 %v1143, 4294901760
    %v1145 = vsub.f32 %v1143, %v1144
    %v1146 = vand.u32 %v1145, 4294901760
    %1147 = vmatpush1.msra.mxu0 %v1146
    %1148 = vmatprep.subr.mxu0 0.0
    %v1149 = vand.u32 %v947, 4294901760
    %v1150 = vsub.f32 %v947, %v1149
    %v1151 = vand.u32 %v1150, 4294901760
    %v1152 = vsub.f32 %v1150, %v1151
    %v1153 = vand.u32 %v1152, 4294901760
    %1154 = vmatpush1.msra.mxu0 %v1153
    %1155 = vmatprep.subr.mxu0 0.0
    %v1156 = vand.u32 %v946, 4294901760
    %v1157 = vsub.f32 %v946, %v1156
    %v1158 = vand.u32 %v1157, 4294901760
    %v1159 = vsub.f32 %v1157, %v1158
    %v1160 = vand.u32 %v1159, 4294901760
    %1161 = vmatpush1.msra.mxu0 %v1160
    %1162 = vmatprep.subr.mxu0 0.0
    %v1163 = vand.u32 %v945, 4294901760
    %v1164 = vsub.f32 %v945, %v1163
    %v1165 = vand.u32 %v1164, 4294901760
    %v1166 = vsub.f32 %v1164, %v1165
    %v1167 = vand.u32 %v1166, 4294901760
    %1168 = vmatpush1.msra.mxu0 %v1167
    %1169 = vmatprep.subr.mxu0 0.0
    %v1170 = vand.u32 %v944, 4294901760
    %v1171 = vsub.f32 %v944, %v1170
    %v1172 = vand.u32 %v1171, 4294901760
    %v1173 = vsub.f32 %v1171, %v1172
    %v1174 = vand.u32 %v1173, 4294901760
    %1175 = vmatpush1.msra.mxu0 %v1174
    %1176 = vmatprep.subr.mxu0 0.0
    %v1177 = vand.u32 %v943, 4294901760
    %v1178 = vsub.f32 %v943, %v1177
    %v1179 = vand.u32 %v1178, 4294901760
    %v1180 = vsub.f32 %v1178, %v1179
    %v1181 = vand.u32 %v1180, 4294901760
    %1182 = vmatpush1.msra.mxu0 %v1181
    %1183 = vmatprep.subr.mxu0 0.0
    %v1184 = vand.u32 %v942, 4294901760
    %v1185 = vsub.f32 %v942, %v1184
    %v1186 = vand.u32 %v1185, 4294901760
    %v1187 = vsub.f32 %v1185, %v1186
    %v1188 = vand.u32 %v1187, 4294901760
    %1189 = vmatpush1.msra.mxu0 %v1188
    %1190 = vmatprep.subr.mxu0 0.0
    %v1191 = vand.u32 %v941, 4294901760
    %v1192 = vsub.f32 %v941, %v1191
    %v1193 = vand.u32 %v1192, 4294901760
    %v1194 = vsub.f32 %v1192, %v1193
    %v1195 = vand.u32 %v1194, 4294901760
    %1196 = vmatpush1.msra.mxu0 %v1195
    %1197 = vmatprep.subr.mxu0 0.0
    %v1198 = vand.u32 %v972, 4294901760
    %v1199 = vsub.f32 %v972, %v1198
    %v1200 = vand.u32 %v1199, 4294901760
    %v1201 = vsub.f32 %v1199, %v1200
    %v1202 = vand.u32 %v1201, 4294901760
    %1203 = vmatpush2.msra.mxu0 %v1202
    %1204 = vmatprep.subr.mxu0 0.0
    %v1205 = vand.u32 %v971, 4294901760
    %v1206 = vsub.f32 %v971, %v1205
    %v1207 = vand.u32 %v1206, 4294901760
    %v1208 = vsub.f32 %v1206, %v1207
    %v1209 = vand.u32 %v1208, 4294901760
    %1210 = vmatpush2.msra.mxu0 %v1209
    %1211 = vmatprep.subr.mxu0 0.0
    %v1212 = vand.u32 %v970, 4294901760
    %v1213 = vsub.f32 %v970, %v1212
    %v1214 = vand.u32 %v1213, 4294901760
    %v1215 = vsub.f32 %v1213, %v1214
    %v1216 = vand.u32 %v1215, 4294901760
    %1217 = vmatpush2.msra.mxu0 %v1216
    %1218 = vmatprep.subr.mxu0 0.0
    %v1219 = vand.u32 %v969, 4294901760
    %v1220 = vsub.f32 %v969, %v1219
    %v1221 = vand.u32 %v1220, 4294901760
    %v1222 = vsub.f32 %v1220, %v1221
    %v1223 = vand.u32 %v1222, 4294901760
    %1224 = vmatpush2.msra.mxu0 %v1223
    %1225 = vmatprep.subr.mxu0 0.0
    %v1226 = vand.u32 %v968, 4294901760
    %v1227 = vsub.f32 %v968, %v1226
    %v1228 = vand.u32 %v1227, 4294901760
    %v1229 = vsub.f32 %v1227, %v1228
    %v1230 = vand.u32 %v1229, 4294901760
    %1231 = vmatpush2.msra.mxu0 %v1230
    %1232 = vmatprep.subr.mxu0 0.0
    %v1233 = vand.u32 %v967, 4294901760
    %v1234 = vsub.f32 %v967, %v1233
    %v1235 = vand.u32 %v1234, 4294901760
    %v1236 = vsub.f32 %v1234, %v1235
    %v1237 = vand.u32 %v1236, 4294901760
    %1238 = vmatpush2.msra.mxu0 %v1237
    %1239 = vmatprep.subr.mxu0 0.0
    %v1240 = vand.u32 %v966, 4294901760
    %v1241 = vsub.f32 %v966, %v1240
    %v1242 = vand.u32 %v1241, 4294901760
    %v1243 = vsub.f32 %v1241, %v1242
    %v1244 = vand.u32 %v1243, 4294901760
    %1245 = vmatpush2.msra.mxu0 %v1244
    %1246 = vmatprep.subr.mxu0 0.0
    %v1247 = vand.u32 %v965, 4294901760
    %v1248 = vsub.f32 %v965, %v1247
    %v1249 = vand.u32 %v1248, 4294901760
    %v1250 = vsub.f32 %v1248, %v1249
    %v1251 = vand.u32 %v1250, 4294901760
    %1252 = vmatpush2.msra.mxu0 %v1251
    %1253 = vmatprep.subr.mxu0 0.0
    %v1254 = vand.u32 %v964, 4294901760
    %v1255 = vsub.f32 %v964, %v1254
    %v1256 = vand.u32 %v1255, 4294901760
    %v1257 = vsub.f32 %v1255, %v1256
    %v1258 = vand.u32 %v1257, 4294901760
    %1259 = vmatpush2.msra.mxu0 %v1258
    %1260 = vmatprep.subr.mxu0 0.0
    %v1261 = vand.u32 %v963, 4294901760
    %v1262 = vsub.f32 %v963, %v1261
    %v1263 = vand.u32 %v1262, 4294901760
    %v1264 = vsub.f32 %v1262, %v1263
    %v1265 = vand.u32 %v1264, 4294901760
    %1266 = vmatpush2.msra.mxu0 %v1265
    %1267 = vmatprep.subr.mxu0 0.0
    %v1268 = vand.u32 %v962, 4294901760
    %v1269 = vsub.f32 %v962, %v1268
    %v1270 = vand.u32 %v1269, 4294901760
    %v1271 = vsub.f32 %v1269, %v1270
    %v1272 = vand.u32 %v1271, 4294901760
    %1273 = vmatpush2.msra.mxu0 %v1272
    %1274 = vmatprep.subr.mxu0 0.0
    %v1275 = vand.u32 %v961, 4294901760
    %v1276 = vsub.f32 %v961, %v1275
    %v1277 = vand.u32 %v1276, 4294901760
    %v1278 = vsub.f32 %v1276, %v1277
    %v1279 = vand.u32 %v1278, 4294901760
    %1280 = vmatpush2.msra.mxu0 %v1279
    %1281 = vmatprep.subr.mxu0 0.0
    %v1282 = vand.u32 %v960, 4294901760
    %v1283 = vsub.f32 %v960, %v1282
    %v1284 = vand.u32 %v1283, 4294901760
    %v1285 = vsub.f32 %v1283, %v1284
    %v1286 = vand.u32 %v1285, 4294901760
    %1287 = vmatpush2.msra.mxu0 %v1286
    %1288 = vmatprep.subr.mxu0 0.0
    %v1289 = vand.u32 %v959, 4294901760
    %v1290 = vsub.f32 %v959, %v1289
    %v1291 = vand.u32 %v1290, 4294901760
    %v1292 = vsub.f32 %v1290, %v1291
    %v1293 = vand.u32 %v1292, 4294901760
    %1294 = vmatpush2.msra.mxu0 %v1293
    %1295 = vmatprep.subr.mxu0 0.0
    %v1296 = vand.u32 %v958, 4294901760
    %v1297 = vsub.f32 %v958, %v1296
    %v1298 = vand.u32 %v1297, 4294901760
    %v1299 = vsub.f32 %v1297, %v1298
    %v1300 = vand.u32 %v1299, 4294901760
    %1301 = vmatpush2.msra.mxu0 %v1300
    %1302 = vmatprep.subr.mxu0 0.0
    %v1303 = vand.u32 %v957, 4294901760
    %v1304 = vsub.f32 %v957, %v1303
    %v1305 = vand.u32 %v1304, 4294901760
    %v1306 = vsub.f32 %v1304, %v1305
    %v1307 = vand.u32 %v1306, 4294901760
    %1308 = vmatpush2.msra.mxu0 %v1307
    %v1309 = vand.u32 %v77, 4294901760
    %1310 = vmatprep.mubr.f32.mxu0 %v1309
    %v1311 = vand.u32 %v43, 4294901760
    %1312 = vmatmul.mubr.f32.gmra.mxu0 %v1311
    %v1313 = vpop.f32.mrf.mxu0
    %v1314 = vadd.f32 %v1082, %v1313
    %v1315 = vpop.f32.mrf.mxu0
    %1316 = vdwg.mxu0
    %1317 = vmatprep.subr.mxu0 0.0
    %v1318 = vand.u32 %v956, 4294901760
    %v1319 = vsub.f32 %v956, %v1318
    %1320 = vmatpush1.msra.mxu0 %v1319
    %1321 = vmatprep.subr.mxu0 0.0
    %v1322 = vand.u32 %v955, 4294901760
    %v1323 = vsub.f32 %v955, %v1322
    %1324 = vmatpush1.msra.mxu0 %v1323
    %1325 = vmatprep.subr.mxu0 0.0
    %v1326 = vand.u32 %v954, 4294901760
    %v1327 = vsub.f32 %v954, %v1326
    %1328 = vmatpush1.msra.mxu0 %v1327
    %1329 = vmatprep.subr.mxu0 0.0
    %v1330 = vand.u32 %v953, 4294901760
    %v1331 = vsub.f32 %v953, %v1330
    %1332 = vmatpush1.msra.mxu0 %v1331
    %1333 = vmatprep.subr.mxu0 0.0
    %v1334 = vand.u32 %v952, 4294901760
    %v1335 = vsub.f32 %v952, %v1334
    %1336 = vmatpush1.msra.mxu0 %v1335
    %1337 = vmatprep.subr.mxu0 0.0
    %v1338 = vand.u32 %v951, 4294901760
    %v1339 = vsub.f32 %v951, %v1338
    %1340 = vmatpush1.msra.mxu0 %v1339
    %1341 = vmatprep.subr.mxu0 0.0
    %v1342 = vand.u32 %v950, 4294901760
    %v1343 = vsub.f32 %v950, %v1342
    %1344 = vmatpush1.msra.mxu0 %v1343
    %1345 = vmatprep.subr.mxu0 0.0
    %v1346 = vand.u32 %v949, 4294901760
    %v1347 = vsub.f32 %v949, %v1346
    %1348 = vmatpush1.msra.mxu0 %v1347
    %1349 = vmatprep.subr.mxu0 0.0
    %v1350 = vand.u32 %v948, 4294901760
    %v1351 = vsub.f32 %v948, %v1350
    %1352 = vmatpush1.msra.mxu0 %v1351
    %1353 = vmatprep.subr.mxu0 0.0
    %v1354 = vand.u32 %v947, 4294901760
    %v1355 = vsub.f32 %v947, %v1354
    %1356 = vmatpush1.msra.mxu0 %v1355
    %1357 = vmatprep.subr.mxu0 0.0
    %v1358 = vand.u32 %v946, 4294901760
    %v1359 = vsub.f32 %v946, %v1358
    %1360 = vmatpush1.msra.mxu0 %v1359
    %1361 = vmatprep.subr.mxu0 0.0
    %v1362 = vand.u32 %v945, 4294901760
    %v1363 = vsub.f32 %v945, %v1362
    %1364 = vmatpush1.msra.mxu0 %v1363
    %1365 = vmatprep.subr.mxu0 0.0
    %v1366 = vand.u32 %v944, 4294901760
    %v1367 = vsub.f32 %v944, %v1366
    %1368 = vmatpush1.msra.mxu0 %v1367
    %1369 = vmatprep.subr.mxu0 0.0
    %v1370 = vand.u32 %v943, 4294901760
    %v1371 = vsub.f32 %v943, %v1370
    %1372 = vmatpush1.msra.mxu0 %v1371
    %1373 = vmatprep.subr.mxu0 0.0
    %v1374 = vand.u32 %v942, 4294901760
    %v1375 = vsub.f32 %v942, %v1374
    %1376 = vmatpush1.msra.mxu0 %v1375
    %1377 = vmatprep.subr.mxu0 0.0
    %v1378 = vand.u32 %v941, 4294901760
    %v1379 = vsub.f32 %v941, %v1378
    %1380 = vmatpush1.msra.mxu0 %v1379
    %1381 = vmatprep.subr.mxu0 0.0
    %v1382 = vand.u32 %v972, 4294901760
    %v1383 = vsub.f32 %v972, %v1382
    %1384 = vmatpush2.msra.mxu0 %v1383
    %1385 = vmatprep.subr.mxu0 0.0
    %v1386 = vand.u32 %v971, 4294901760
    %v1387 = vsub.f32 %v971, %v1386
    %1388 = vmatpush2.msra.mxu0 %v1387
    %1389 = vmatprep.subr.mxu0 0.0
    %v1390 = vand.u32 %v970, 4294901760
    %v1391 = vsub.f32 %v970, %v1390
    %1392 = vmatpush2.msra.mxu0 %v1391
    %1393 = vmatprep.subr.mxu0 0.0
    %v1394 = vand.u32 %v969, 4294901760
    %v1395 = vsub.f32 %v969, %v1394
    %1396 = vmatpush2.msra.mxu0 %v1395
    %1397 = vmatprep.subr.mxu0 0.0
    %v1398 = vand.u32 %v968, 4294901760
    %v1399 = vsub.f32 %v968, %v1398
    %1400 = vmatpush2.msra.mxu0 %v1399
    %1401 = vmatprep.subr.mxu0 0.0
    %v1402 = vand.u32 %v967, 4294901760
    %v1403 = vsub.f32 %v967, %v1402
    %1404 = vmatpush2.msra.mxu0 %v1403
    %1405 = vmatprep.subr.mxu0 0.0
    %v1406 = vand.u32 %v966, 4294901760
    %v1407 = vsub.f32 %v966, %v1406
    %1408 = vmatpush2.msra.mxu0 %v1407
    %1409 = vmatprep.subr.mxu0 0.0
    %v1410 = vand.u32 %v965, 4294901760
    %v1411 = vsub.f32 %v965, %v1410
    %1412 = vmatpush2.msra.mxu0 %v1411
    %1413 = vmatprep.subr.mxu0 0.0
    %v1414 = vand.u32 %v964, 4294901760
    %v1415 = vsub.f32 %v964, %v1414
    %1416 = vmatpush2.msra.mxu0 %v1415
    %1417 = vmatprep.subr.mxu0 0.0
    %v1418 = vand.u32 %v963, 4294901760
    %v1419 = vsub.f32 %v963, %v1418
    %1420 = vmatpush2.msra.mxu0 %v1419
    %1421 = vmatprep.subr.mxu0 0.0
    %v1422 = vand.u32 %v962, 4294901760
    %v1423 = vsub.f32 %v962, %v1422
    %1424 = vmatpush2.msra.mxu0 %v1423
    %1425 = vmatprep.subr.mxu0 0.0
    %v1426 = vand.u32 %v961, 4294901760
    %v1427 = vsub.f32 %v961, %v1426
    %1428 = vmatpush2.msra.mxu0 %v1427
    %1429 = vmatprep.subr.mxu0 0.0
    %v1430 = vand.u32 %v960, 4294901760
    %v1431 = vsub.f32 %v960, %v1430
    %1432 = vmatpush2.msra.mxu0 %v1431
    %1433 = vmatprep.subr.mxu0 0.0
    %v1434 = vand.u32 %v959, 4294901760
    %v1435 = vsub.f32 %v959, %v1434
    %1436 = vmatpush2.msra.mxu0 %v1435
    %1437 = vmatprep.subr.mxu0 0.0
    %v1438 = vand.u32 %v958, 4294901760
    %v1439 = vsub.f32 %v958, %v1438
    %1440 = vmatpush2.msra.mxu0 %v1439
    %1441 = vmatprep.subr.mxu0 0.0
    %v1442 = vand.u32 %v957, 4294901760
    %v1443 = vsub.f32 %v957, %v1442
    %1444 = vmatpush2.msra.mxu0 %v1443
    %v1445 = vand.u32 %v77, 4294901760
    %v1446 = vsub.f32 %v77, %v1445
    %1447 = vmatprep.mubr.f32.mxu0 %v1446
    %v1448 = vand.u32 %v43, 4294901760
    %v1449 = vsub.f32 %v43, %v1448
    %1450 = vmatmul.mubr.f32.gmra.mxu0 %v1449
    %v1451 = vpop.f32.mrf.mxu0
    %v1452 = vadd.f32 %v1314, %v1451
    %v1453 = vpop.f32.mrf.mxu0
    %1454 = vdwg.mxu0
    %1455 = vmatprep.subr.mxu0 0.0
    %v1456 = vand.u32 %v956, 4294901760
    %1457 = vmatpush1.msra.mxu0 %v1456
    %1458 = vmatprep.subr.mxu0 0.0
    %v1459 = vand.u32 %v955, 4294901760
    %1460 = vmatpush1.msra.mxu0 %v1459
    %1461 = vmatprep.subr.mxu0 0.0
    %v1462 = vand.u32 %v954, 4294901760
    %1463 = vmatpush1.msra.mxu0 %v1462
    %1464 = vmatprep.subr.mxu0 0.0
    %v1465 = vand.u32 %v953, 4294901760
    %1466 = vmatpush1.msra.mxu0 %v1465
    %1467 = vmatprep.subr.mxu0 0.0
    %v1468 = vand.u32 %v952, 4294901760
    %1469 = vmatpush1.msra.mxu0 %v1468
    %1470 = vmatprep.subr.mxu0 0.0
    %v1471 = vand.u32 %v951, 4294901760
    %1472 = vmatpush1.msra.mxu0 %v1471
    %1473 = vmatprep.subr.mxu0 0.0
    %v1474 = vand.u32 %v950, 4294901760
    %1475 = vmatpush1.msra.mxu0 %v1474
    %1476 = vmatprep.subr.mxu0 0.0
    %v1477 = vand.u32 %v949, 4294901760
    %1478 = vmatpush1.msra.mxu0 %v1477
    %1479 = vmatprep.subr.mxu0 0.0
    %v1480 = vand.u32 %v948, 4294901760
    %1481 = vmatpush1.msra.mxu0 %v1480
    %1482 = vmatprep.subr.mxu0 0.0
    %v1483 = vand.u32 %v947, 4294901760
    %1484 = vmatpush1.msra.mxu0 %v1483
    %1485 = vmatprep.subr.mxu0 0.0
    %v1486 = vand.u32 %v946, 4294901760
    %1487 = vmatpush1.msra.mxu0 %v1486
    %1488 = vmatprep.subr.mxu0 0.0
    %v1489 = vand.u32 %v945, 4294901760
    %1490 = vmatpush1.msra.mxu0 %v1489
    %1491 = vmatprep.subr.mxu0 0.0
    %v1492 = vand.u32 %v944, 4294901760
    %1493 = vmatpush1.msra.mxu0 %v1492
    %1494 = vmatprep.subr.mxu0 0.0
    %v1495 = vand.u32 %v943, 4294901760
    %1496 = vmatpush1.msra.mxu0 %v1495
    %1497 = vmatprep.subr.mxu0 0.0
    %v1498 = vand.u32 %v942, 4294901760
    %1499 = vmatpush1.msra.mxu0 %v1498
    %1500 = vmatprep.subr.mxu0 0.0
    %v1501 = vand.u32 %v941, 4294901760
    %1502 = vmatpush1.msra.mxu0 %v1501
    %1503 = vmatprep.subr.mxu0 0.0
    %v1504 = vand.u32 %v972, 4294901760
    %1505 = vmatpush2.msra.mxu0 %v1504
    %1506 = vmatprep.subr.mxu0 0.0
    %v1507 = vand.u32 %v971, 4294901760
    %1508 = vmatpush2.msra.mxu0 %v1507
    %1509 = vmatprep.subr.mxu0 0.0
    %v1510 = vand.u32 %v970, 4294901760
    %1511 = vmatpush2.msra.mxu0 %v1510
    %1512 = vmatprep.subr.mxu0 0.0
    %v1513 = vand.u32 %v969, 4294901760
    %1514 = vmatpush2.msra.mxu0 %v1513
    %1515 = vmatprep.subr.mxu0 0.0
    %v1516 = vand.u32 %v968, 4294901760
    %1517 = vmatpush2.msra.mxu0 %v1516
    %1518 = vmatprep.subr.mxu0 0.0
    %v1519 = vand.u32 %v967, 4294901760
    %1520 = vmatpush2.msra.mxu0 %v1519
    %1521 = vmatprep.subr.mxu0 0.0
    %v1522 = vand.u32 %v966, 4294901760
    %1523 = vmatpush2.msra.mxu0 %v1522
    %1524 = vmatprep.subr.mxu0 0.0
    %v1525 = vand.u32 %v965, 4294901760
    %1526 = vmatpush2.msra.mxu0 %v1525
    %1527 = vmatprep.subr.mxu0 0.0
    %v1528 = vand.u32 %v964, 4294901760
    %1529 = vmatpush2.msra.mxu0 %v1528
    %1530 = vmatprep.subr.mxu0 0.0
    %v1531 = vand.u32 %v963, 4294901760
    %1532 = vmatpush2.msra.mxu0 %v1531
    %1533 = vmatprep.subr.mxu0 0.0
    %v1534 = vand.u32 %v962, 4294901760
    %1535 = vmatpush2.msra.mxu0 %v1534
    %1536 = vmatprep.subr.mxu0 0.0
    %v1537 = vand.u32 %v961, 4294901760
    %1538 = vmatpush2.msra.mxu0 %v1537
    %1539 = vmatprep.subr.mxu0 0.0
    %v1540 = vand.u32 %v960, 4294901760
    %1541 = vmatpush2.msra.mxu0 %v1540
    %1542 = vmatprep.subr.mxu0 0.0
    %v1543 = vand.u32 %v959, 4294901760
    %1544 = vmatpush2.msra.mxu0 %v1543
    %1545 = vmatprep.subr.mxu0 0.0
    %v1546 = vand.u32 %v958, 4294901760
    %1547 = vmatpush2.msra.mxu0 %v1546
    %1548 = vmatprep.subr.mxu0 0.0
    %v1549 = vand.u32 %v957, 4294901760
    %1550 = vmatpush2.msra.mxu0 %v1549
    %v1551 = vand.u32 %v77, 4294901760
    %v1552 = vsub.f32 %v77, %v1551
    %v1553 = vand.u32 %v1552, 4294901760
    %1554 = vmatprep.mubr.f32.mxu0 %v1553
    %v1555 = vand.u32 %v43, 4294901760
    %v1556 = vsub.f32 %v43, %v1555
    %v1557 = vand.u32 %v1556, 4294901760
    %1558 = vmatmul.mubr.f32.gmra.mxu0 %v1557
    %v1559 = vpop.f32.mrf.mxu0
    %v1560 = vadd.f32 %v1452, %v1559
    %v1561 = vpop.f32.mrf.mxu0
    %1562 = vdwg.mxu0
    %1563 = vmatprep.subr.mxu0 0.0
    %v1564 = vand.u32 %v956, 4294901760
    %v1565 = vsub.f32 %v956, %v1564
    %v1566 = vand.u32 %v1565, 4294901760
    %1567 = vmatpush1.msra.mxu0 %v1566
    %1568 = vmatprep.subr.mxu0 0.0
    %v1569 = vand.u32 %v955, 4294901760
    %v1570 = vsub.f32 %v955, %v1569
    %v1571 = vand.u32 %v1570, 4294901760
    %1572 = vmatpush1.msra.mxu0 %v1571
    %1573 = vmatprep.subr.mxu0 0.0
    %v1574 = vand.u32 %v954, 4294901760
    %v1575 = vsub.f32 %v954, %v1574
    %v1576 = vand.u32 %v1575, 4294901760
    %1577 = vmatpush1.msra.mxu0 %v1576
    %1578 = vmatprep.subr.mxu0 0.0
    %v1579 = vand.u32 %v953, 4294901760
    %v1580 = vsub.f32 %v953, %v1579
    %v1581 = vand.u32 %v1580, 4294901760
    %1582 = vmatpush1.msra.mxu0 %v1581
    %1583 = vmatprep.subr.mxu0 0.0
    %v1584 = vand.u32 %v952, 4294901760
    %v1585 = vsub.f32 %v952, %v1584
    %v1586 = vand.u32 %v1585, 4294901760
    %1587 = vmatpush1.msra.mxu0 %v1586
    %1588 = vmatprep.subr.mxu0 0.0
    %v1589 = vand.u32 %v951, 4294901760
    %v1590 = vsub.f32 %v951, %v1589
    %v1591 = vand.u32 %v1590, 4294901760
    %1592 = vmatpush1.msra.mxu0 %v1591
    %1593 = vmatprep.subr.mxu0 0.0
    %v1594 = vand.u32 %v950, 4294901760
    %v1595 = vsub.f32 %v950, %v1594
    %v1596 = vand.u32 %v1595, 4294901760
    %1597 = vmatpush1.msra.mxu0 %v1596
    %1598 = vmatprep.subr.mxu0 0.0
    %v1599 = vand.u32 %v949, 4294901760
    %v1600 = vsub.f32 %v949, %v1599
    %v1601 = vand.u32 %v1600, 4294901760
    %1602 = vmatpush1.msra.mxu0 %v1601
    %1603 = vmatprep.subr.mxu0 0.0
    %v1604 = vand.u32 %v948, 4294901760
    %v1605 = vsub.f32 %v948, %v1604
    %v1606 = vand.u32 %v1605, 4294901760
    %1607 = vmatpush1.msra.mxu0 %v1606
    %1608 = vmatprep.subr.mxu0 0.0
    %v1609 = vand.u32 %v947, 4294901760
    %v1610 = vsub.f32 %v947, %v1609
    %v1611 = vand.u32 %v1610, 4294901760
    %1612 = vmatpush1.msra.mxu0 %v1611
    %1613 = vmatprep.subr.mxu0 0.0
    %v1614 = vand.u32 %v946, 4294901760
    %v1615 = vsub.f32 %v946, %v1614
    %v1616 = vand.u32 %v1615, 4294901760
    %1617 = vmatpush1.msra.mxu0 %v1616
    %1618 = vmatprep.subr.mxu0 0.0
    %v1619 = vand.u32 %v945, 4294901760
    %v1620 = vsub.f32 %v945, %v1619
    %v1621 = vand.u32 %v1620, 4294901760
    %1622 = vmatpush1.msra.mxu0 %v1621
    %1623 = vmatprep.subr.mxu0 0.0
    %v1624 = vand.u32 %v944, 4294901760
    %v1625 = vsub.f32 %v944, %v1624
    %v1626 = vand.u32 %v1625, 4294901760
    %1627 = vmatpush1.msra.mxu0 %v1626
    %1628 = vmatprep.subr.mxu0 0.0
    %v1629 = vand.u32 %v943, 4294901760
    %v1630 = vsub.f32 %v943, %v1629
    %v1631 = vand.u32 %v1630, 4294901760
    %1632 = vmatpush1.msra.mxu0 %v1631
    %1633 = vmatprep.subr.mxu0 0.0
    %v1634 = vand.u32 %v942, 4294901760
    %v1635 = vsub.f32 %v942, %v1634
    %v1636 = vand.u32 %v1635, 4294901760
    %1637 = vmatpush1.msra.mxu0 %v1636
    %1638 = vmatprep.subr.mxu0 0.0
    %v1639 = vand.u32 %v941, 4294901760
    %v1640 = vsub.f32 %v941, %v1639
    %v1641 = vand.u32 %v1640, 4294901760
    %1642 = vmatpush1.msra.mxu0 %v1641
    %1643 = vmatprep.subr.mxu0 0.0
    %v1644 = vand.u32 %v972, 4294901760
    %v1645 = vsub.f32 %v972, %v1644
    %v1646 = vand.u32 %v1645, 4294901760
    %1647 = vmatpush2.msra.mxu0 %v1646
    %1648 = vmatprep.subr.mxu0 0.0
    %v1649 = vand.u32 %v971, 4294901760
    %v1650 = vsub.f32 %v971, %v1649
    %v1651 = vand.u32 %v1650, 4294901760
    %1652 = vmatpush2.msra.mxu0 %v1651
    %1653 = vmatprep.subr.mxu0 0.0
    %v1654 = vand.u32 %v970, 4294901760
    %v1655 = vsub.f32 %v970, %v1654
    %v1656 = vand.u32 %v1655, 4294901760
    %1657 = vmatpush2.msra.mxu0 %v1656
    %1658 = vmatprep.subr.mxu0 0.0
    %v1659 = vand.u32 %v969, 4294901760
    %v1660 = vsub.f32 %v969, %v1659
    %v1661 = vand.u32 %v1660, 4294901760
    %1662 = vmatpush2.msra.mxu0 %v1661
    %1663 = vmatprep.subr.mxu0 0.0
    %v1664 = vand.u32 %v968, 4294901760
    %v1665 = vsub.f32 %v968, %v1664
    %v1666 = vand.u32 %v1665, 4294901760
    %1667 = vmatpush2.msra.mxu0 %v1666
    %1668 = vmatprep.subr.mxu0 0.0
    %v1669 = vand.u32 %v967, 4294901760
    %v1670 = vsub.f32 %v967, %v1669
    %v1671 = vand.u32 %v1670, 4294901760
    %1672 = vmatpush2.msra.mxu0 %v1671
    %1673 = vmatprep.subr.mxu0 0.0
    %v1674 = vand.u32 %v966, 4294901760
    %v1675 = vsub.f32 %v966, %v1674
    %v1676 = vand.u32 %v1675, 4294901760
    %1677 = vmatpush2.msra.mxu0 %v1676
    %1678 = vmatprep.subr.mxu0 0.0
    %v1679 = vand.u32 %v965, 4294901760
    %v1680 = vsub.f32 %v965, %v1679
    %v1681 = vand.u32 %v1680, 4294901760
    %1682 = vmatpush2.msra.mxu0 %v1681
    %1683 = vmatprep.subr.mxu0 0.0
    %v1684 = vand.u32 %v964, 4294901760
    %v1685 = vsub.f32 %v964, %v1684
    %v1686 = vand.u32 %v1685, 4294901760
    %1687 = vmatpush2.msra.mxu0 %v1686
    %1688 = vmatprep.subr.mxu0 0.0
    %v1689 = vand.u32 %v963, 4294901760
    %v1690 = vsub.f32 %v963, %v1689
    %v1691 = vand.u32 %v1690, 4294901760
    %1692 = vmatpush2.msra.mxu0 %v1691
    %1693 = vmatprep.subr.mxu0 0.0
    %v1694 = vand.u32 %v962, 4294901760
    %v1695 = vsub.f32 %v962, %v1694
    %v1696 = vand.u32 %v1695, 4294901760
    %1697 = vmatpush2.msra.mxu0 %v1696
    %1698 = vmatprep.subr.mxu0 0.0
    %v1699 = vand.u32 %v961, 4294901760
    %v1700 = vsub.f32 %v961, %v1699
    %v1701 = vand.u32 %v1700, 4294901760
    %1702 = vmatpush2.msra.mxu0 %v1701
    %1703 = vmatprep.subr.mxu0 0.0
    %v1704 = vand.u32 %v960, 4294901760
    %v1705 = vsub.f32 %v960, %v1704
    %v1706 = vand.u32 %v1705, 4294901760
    %1707 = vmatpush2.msra.mxu0 %v1706
    %1708 = vmatprep.subr.mxu0 0.0
    %v1709 = vand.u32 %v959, 4294901760
    %v1710 = vsub.f32 %v959, %v1709
    %v1711 = vand.u32 %v1710, 4294901760
    %1712 = vmatpush2.msra.mxu0 %v1711
    %1713 = vmatprep.subr.mxu0 0.0
    %v1714 = vand.u32 %v958, 4294901760
    %v1715 = vsub.f32 %v958, %v1714
    %v1716 = vand.u32 %v1715, 4294901760
    %1717 = vmatpush2.msra.mxu0 %v1716
    %1718 = vmatprep.subr.mxu0 0.0
    %v1719 = vand.u32 %v957, 4294901760
    %v1720 = vsub.f32 %v957, %v1719
    %v1721 = vand.u32 %v1720, 4294901760
    %1722 = vmatpush2.msra.mxu0 %v1721
    %v1723 = vand.u32 %v77, 4294901760
    %1724 = vmatprep.mubr.f32.mxu0 %v1723
    %v1725 = vand.u32 %v43, 4294901760
    %1726 = vmatmul.mubr.f32.gmra.mxu0 %v1725
    %v1727 = vpop.f32.mrf.mxu0
    %v1728 = vadd.f32 %v1560, %v1727
    %v1729 = vpop.f32.mrf.mxu0
    %1730 = vdwg.mxu0
    %1731 = vmatprep.subr.mxu0 0.0
    %v1732 = vand.u32 %v956, 4294901760
    %1733 = vmatpush1.msra.mxu0 %v1732
    %1734 = vmatprep.subr.mxu0 0.0
    %v1735 = vand.u32 %v955, 4294901760
    %1736 = vmatpush1.msra.mxu0 %v1735
    %1737 = vmatprep.subr.mxu0 0.0
    %v1738 = vand.u32 %v954, 4294901760
    %1739 = vmatpush1.msra.mxu0 %v1738
    %1740 = vmatprep.subr.mxu0 0.0
    %v1741 = vand.u32 %v953, 4294901760
    %1742 = vmatpush1.msra.mxu0 %v1741
    %1743 = vmatprep.subr.mxu0 0.0
    %v1744 = vand.u32 %v952, 4294901760
    %1745 = vmatpush1.msra.mxu0 %v1744
    %1746 = vmatprep.subr.mxu0 0.0
    %v1747 = vand.u32 %v951, 4294901760
    %1748 = vmatpush1.msra.mxu0 %v1747
    %1749 = vmatprep.subr.mxu0 0.0
    %v1750 = vand.u32 %v950, 4294901760
    %1751 = vmatpush1.msra.mxu0 %v1750
    %1752 = vmatprep.subr.mxu0 0.0
    %v1753 = vand.u32 %v949, 4294901760
    %1754 = vmatpush1.msra.mxu0 %v1753
    %1755 = vmatprep.subr.mxu0 0.0
    %v1756 = vand.u32 %v948, 4294901760
    %1757 = vmatpush1.msra.mxu0 %v1756
    %1758 = vmatprep.subr.mxu0 0.0
    %v1759 = vand.u32 %v947, 4294901760
    %1760 = vmatpush1.msra.mxu0 %v1759
    %1761 = vmatprep.subr.mxu0 0.0
    %v1762 = vand.u32 %v946, 4294901760
    %1763 = vmatpush1.msra.mxu0 %v1762
    %1764 = vmatprep.subr.mxu0 0.0
    %v1765 = vand.u32 %v945, 4294901760
    %1766 = vmatpush1.msra.mxu0 %v1765
    %1767 = vmatprep.subr.mxu0 0.0
    %v1768 = vand.u32 %v944, 4294901760
    %1769 = vmatpush1.msra.mxu0 %v1768
    %1770 = vmatprep.subr.mxu0 0.0
    %v1771 = vand.u32 %v943, 4294901760
    %1772 = vmatpush1.msra.mxu0 %v1771
    %1773 = vmatprep.subr.mxu0 0.0
    %v1774 = vand.u32 %v942, 4294901760
    %1775 = vmatpush1.msra.mxu0 %v1774
    %1776 = vmatprep.subr.mxu0 0.0
    %v1777 = vand.u32 %v941, 4294901760
    %1778 = vmatpush1.msra.mxu0 %v1777
    %1779 = vmatprep.subr.mxu0 0.0
    %v1780 = vand.u32 %v972, 4294901760
    %1781 = vmatpush2.msra.mxu0 %v1780
    %1782 = vmatprep.subr.mxu0 0.0
    %v1783 = vand.u32 %v971, 4294901760
    %1784 = vmatpush2.msra.mxu0 %v1783
    %1785 = vmatprep.subr.mxu0 0.0
    %v1786 = vand.u32 %v970, 4294901760
    %1787 = vmatpush2.msra.mxu0 %v1786
    %1788 = vmatprep.subr.mxu0 0.0
    %v1789 = vand.u32 %v969, 4294901760
    %1790 = vmatpush2.msra.mxu0 %v1789
    %1791 = vmatprep.subr.mxu0 0.0
    %v1792 = vand.u32 %v968, 4294901760
    %1793 = vmatpush2.msra.mxu0 %v1792
    %1794 = vmatprep.subr.mxu0 0.0
    %v1795 = vand.u32 %v967, 4294901760
    %1796 = vmatpush2.msra.mxu0 %v1795
    %1797 = vmatprep.subr.mxu0 0.0
    %v1798 = vand.u32 %v966, 4294901760
    %1799 = vmatpush2.msra.mxu0 %v1798
    %1800 = vmatprep.subr.mxu0 0.0
    %v1801 = vand.u32 %v965, 4294901760
    %1802 = vmatpush2.msra.mxu0 %v1801
    %1803 = vmatprep.subr.mxu0 0.0
    %v1804 = vand.u32 %v964, 4294901760
    %1805 = vmatpush2.msra.mxu0 %v1804
    %1806 = vmatprep.subr.mxu0 0.0
    %v1807 = vand.u32 %v963, 4294901760
    %1808 = vmatpush2.msra.mxu0 %v1807
    %1809 = vmatprep.subr.mxu0 0.0
    %v1810 = vand.u32 %v962, 4294901760
    %1811 = vmatpush2.msra.mxu0 %v1810
    %1812 = vmatprep.subr.mxu0 0.0
    %v1813 = vand.u32 %v961, 4294901760
    %1814 = vmatpush2.msra.mxu0 %v1813
    %1815 = vmatprep.subr.mxu0 0.0
    %v1816 = vand.u32 %v960, 4294901760
    %1817 = vmatpush2.msra.mxu0 %v1816
    %1818 = vmatprep.subr.mxu0 0.0
    %v1819 = vand.u32 %v959, 4294901760
    %1820 = vmatpush2.msra.mxu0 %v1819
    %1821 = vmatprep.subr.mxu0 0.0
    %v1822 = vand.u32 %v958, 4294901760
    %1823 = vmatpush2.msra.mxu0 %v1822
    %1824 = vmatprep.subr.mxu0 0.0
    %v1825 = vand.u32 %v957, 4294901760
    %1826 = vmatpush2.msra.mxu0 %v1825
    %v1827 = vand.u32 %v77, 4294901760
    %1828 = vmatprep.mubr.f32.mxu0 %v1827
    %v1829 = vand.u32 %v43, 4294901760
    %1830 = vmatmul.mubr.f32.gmra.mxu0 %v1829
    %v1831 = vpop.f32.mrf.mxu0
    %v1832 = vadd.f32 %v1728, %v1831
    %v1833 = vpop.f32.mrf.mxu0
    %1834 = vdwg.mxu0
    %v1835 = vmul.f32 %v938, %v938
    %v1836 = vmul.f32 %v1832, %v1832
    %v1837 = vadd.f32 %v1835, %v1836
    %v1838 = vlaneseq
    %v1839 = vand.u32 %v1838, 127
    %vm1840 = vcmask 896000
    %v1841 = vsel %vm1840, %v1837, -inf
    %1842 = vmax.xlane.f32.xlu0 %v1841
    %v1843 = vpop.xlane.xlu0 %1842
    %v1844 = vcvt.s32.f32 %v1839
    %vm1845 = vcmp.eq.f32.partialorder %v1837, %v1843
    %v1846 = vsel %vm1845, %v1844, 1e+09
    %v1847 = vsel %vm1840, %v1846, inf
    %1848 = vmin.xlane.f32.xlu0 %v1847
    %v1849 = vpop.xlane.xlu0 %1848
    %v1850 = vcvt.f32.s32.to.zero.pseudo %v1849
    %v1851 = vadd.s32 %v1850, 40
    %vm1852 = vcmask 3072
    %1853 = vst.msk [vmem:[%s6] sm:$0xf] %vm1852, %v1851
    %1854 = vset.pattern.permute.xlu0 0
    %1855 = vperm.xlu0 %1854, %v29
    %v1856 = vpop.permute.xlu0 %1855
    %vm1857 = vcmp.eq.s32.totalorder %v1839, %v1856
    %v1858 = vsel %vm1857, %v1837, 0.0
    %v1859 = vsel %vm1840, %v1858, 0.0
    %1860 = vadd.xlane.f32.xlu0 %v1859
    %v1861 = vpop.xlane.xlu0 %1860
    %v1862 = vsub.f32 %v1837, %v1843
    %v1863 = vmul.f32 %v1862, 1.442695
    %v1864 = vpow.pop %v1863
    %v1865 = vsel %vm1840, %v1864, 0.0
    %1866 = vadd.xlane.f32.xlu0 %v1865
    %v1867 = vpop.xlane.xlu0 %1866
    %v1868 = vlog2.pop %v1867
    %v1869 = vmul.f32 %v1868, 0.6931472
    %v1870 = vadd.f32 %v1843, %v1869
    %v1871 = vsub.f32 %v1870, %v1861
    %v1872 = vsel %vm1852, %v1871, 0.0
    %1873 = vadd.xlane.f32.xlu0 %v1872
    %v1874 = vpop.xlane.xlu0 %1873
    %v1875 = vrot.slane %v1874, 4
    %v1876 = vadd.f32 %v1874, %v1875
    %v1877 = vrot.slane %v1876, 2
    %v1878 = vadd.f32 %v1876, %v1877
    %v1879 = vrot.slane %v1878, 1
    %v1880 = vadd.f32 %v1878, %v1879
    %s1881 = vtos %v1880
    %v1882 = vrcp.pop 4.0
    %s1883 = vtos %v1882
    %s1884 = smul.f32 %s1881, %s1883
    %s1885 = scalar_lea.smem [#allocation2], 0
    %1886 = sst [smem:[%s1885]] %s1884
    // Predicated region
    $region22: #{tpu_custom_call.1} parent=1 // pred_check
      _
    $region23: #{tpu_custom_call.1} parent=1 // pred_check_branch
      %1888 = sbr.rel (0) target = $region25
    $region24: #{tpu_custom_call.1} parent=1 // pred_region
      %s1890 = ssub.s32 16, 16
      %1891 = vsyncadd [#allocation3], %s1890
      %1894 = dma.smem_to_hbm [#allocation2], 16, %s5, [#allocation3]
    $region25: #{tpu_custom_call.1} parent=1 // pred_fallthru
      _
    // Predicated region
    $region26: #{tpu_custom_call.1} parent=1 // pred_check
      _
    $region27: #{tpu_custom_call.1} parent=1 // pred_check_branch
      %1896 = sbr.rel (0) target = $region29
    $region28: #{tpu_custom_call.1} parent=1 // pred_region
      _
    $region29: #{tpu_custom_call.1} parent=1 // pred_fallthru
      _
    // Predicated region
    $region30: #{tpu_custom_call.1} parent=1 // pred_check
      _
    $region31: #{tpu_custom_call.1} parent=1 // pred_check_branch
      %1898 = sbr.rel (0) target = $region33
    $region32: #{tpu_custom_call.1} parent=1 // pred_region
      %1899 = dma.done [#allocation3], 16
    $region33: #{tpu_custom_call.1} parent=1 // pred_fallthru
      _
    // Predicated region
    $region34: #{tpu_custom_call.1} parent=1 // pred_check
      _
    $region35: #{tpu_custom_call.1} parent=1 // pred_check_branch
      %1901 = sbr.rel (0) target = $region37
    $region36: #{tpu_custom_call.1} parent=1 // pred_region
      _
    $region37: #{tpu_custom_call.1} parent=1 // pred_fallthru
      _
    %1902 = sfence
    %1903 = vsyncpa [#allocation3], 1

</llo_original>
